<compile_context>
chip_gen: v6e
topology: v6e:2x2x1
jax: 0.10.0
libtpu: 0.0.40
codegen_flags: <defaults>
</compile_context>

<pallas_src>
import functools

import jax
import jax.numpy as jnp
from jax import lax
from jax.experimental import pallas as pl
from jax.experimental.pallas import tpu as pltpu


def _round_up(x, m):
    return (x + m - 1) // m * m


# ----------------------------------------------------------------------------
# Shared in-kernel math: fused matmul output -> LeakyReLU(0.2)(x) * sigmoid(m)
# ----------------------------------------------------------------------------
def _gated_activation(xm, c_pad):
    x = xm[:, :c_pad]                       # conv2d branch
    m = xm[:, c_pad:]                       # mask_conv2d branch
    x = jnp.where(x >= 0.0, x, 0.2 * x)     # LeakyReLU(0.2)
    gate = 1.0 / (1.0 + jnp.exp(-m))        # exact sigmoid (EUP exp + VPU div)
    return x * gate                         # (tm, Cp) f32


# ----------------------------------------------------------------------------
# Kernel 1 (stats-only pass): per-tile partial sums / sums-of-squares.
# Grid is fully "parallel": each tile owns its own (1, 8, Cp) partial block
# (row 0 = sum, row 1 = sumsq, rows 2..7 = 0), reduced later in JAX.
# ----------------------------------------------------------------------------
def _gated_conv_stats_kernel(p_ref, w_ref, b_ref, part_ref, *, c_pad):
    xm = jnp.dot(p_ref[...], w_ref[...], preferred_element_type=jnp.float32)
    y = _gated_activation(xm + b_ref[...], c_pad)            # (tm, Cp) f32
    s = jnp.sum(y, axis=0, keepdims=True)                    # (1, Cp)
    q = jnp.sum(y * y, axis=0, keepdims=True)                # (1, Cp)
    row = lax.broadcasted_iota(jnp.int32, (8, c_pad), 0)
    st = jnp.where(row == 0, s, 0.0) + jnp.where(row == 1, q, 0.0)
    part_ref[...] = st[None]                                  # (1, 8, Cp)


# ----------------------------------------------------------------------------
# Kernel 2 (apply pass): recompute the fused matmul + gating and write the
# BatchNorm-normalized output directly (no y intermediate in HBM).
# ----------------------------------------------------------------------------
def _gated_conv_bn_apply_kernel(p_ref, w_ref, b_ref, mean_ref, istd_ref,
                                o_ref, *, c_pad):
    xm = jnp.dot(p_ref[...], w_ref[...], preferred_element_type=jnp.float32)
    y = _gated_activation(xm + b_ref[...], c_pad)
    o_ref[...] = (y - mean_ref[...]) * istd_ref[...]


def _gated_conv_bn_pallas(patches_p, w_fused, b_fused, m_real, *, tm):
    mp, k = patches_p.shape
    two_cp = w_fused.shape[1]
    cp = two_cp // 2
    n_tiles = mp // tm
    grid = (n_tiles,)

    common_in_specs = [
        pl.BlockSpec((tm, k), lambda i: (i, 0)),        # patches tile (bf16, unpadded K)
        pl.BlockSpec((k, two_cp), lambda i: (0, 0)),    # fused weights (resident)
        pl.BlockSpec((1, two_cp), lambda i: (0, 0)),    # fused bias (f32)
    ]
    # Per-tile VMEM footprint is tiny (<~1.5 MiB at tm=1024 for this K), far
    # below all generations' VMEM; 32 MiB limit is safe on v5e/v6e/v7x alike.
    cparams = pltpu.CompilerParams(
        dimension_semantics=("parallel",),
        vmem_limit_bytes=32 * 1024 * 1024,
    )

    # ---- Pass 1: per-tile BN statistic partials ------------------------------
    partials = pl.pallas_call(
        functools.partial(_gated_conv_stats_kernel, c_pad=cp),
        out_shape=jax.ShapeDtypeStruct((n_tiles, 8, cp), jnp.float32),
        grid_spec=pltpu.PrefetchScalarGridSpec(
            num_scalar_prefetch=0,
            grid=grid,
            in_specs=common_in_specs,
            out_specs=pl.BlockSpec((1, 8, cp), lambda i: (i, 0, 0)),
        ),
        compiler_params=cparams,
    )(patches_p, w_fused, b_fused)

    # Tiny host-side reduction of f32 per-tile partials (mitigates single-pass
    # E[x^2]-E[x]^2 cancellation for large M), plus exact removal of the
    # all-zero M-padding rows (their y is the bias-only per-channel constant).
    sums = jnp.sum(partials[:, 0, :], axis=0)                 # (Cp,)
    sqs = jnp.sum(partials[:, 1, :], axis=0)                  # (Cp,)
    n_pad = mp - m_real
    if n_pad:
        bx = b_fused[0, :cp]
        bm = b_fused[0, cp:]
        y_pad = jnp.where(bx >= 0.0, bx, 0.2 * bx) * (1.0 / (1.0 + jnp.exp(-bm)))
        sums = sums - n_pad * y_pad
        sqs = sqs - n_pad * y_pad * y_pad
    inv_m = 1.0 / float(m_real)
    mean = sums * inv_m
    var = jnp.maximum(sqs * inv_m - mean * mean, 0.0)
    inv_std = lax.rsqrt(var + 1e-5)

    # ---- Pass 2: recompute matmul + gating, write normalized output ---------
    out_flat = pl.pallas_call(
        functools.partial(_gated_conv_bn_apply_kernel, c_pad=cp),
        out_shape=jax.ShapeDtypeStruct((mp, cp), jnp.float32),
        grid_spec=pltpu.PrefetchScalarGridSpec(
            num_scalar_prefetch=0,
            grid=grid,
            in_specs=common_in_specs + [
                pl.BlockSpec((1, cp), lambda i: (0, 0)),     # mean
                pl.BlockSpec((1, cp), lambda i: (0, 0)),     # inv_std
            ],
            out_specs=pl.BlockSpec((tm, cp), lambda i: (i, 0)),  # lane-dense
        ),
        compiler_params=cparams,
    )(patches_p, w_fused, b_fused, mean[None, :], inv_std[None, :])
    return out_flat


# ----------------------------------------------------------------------------
# JAX glue: spectral norm, im2col, layout plumbing.
# ----------------------------------------------------------------------------
def _l2_normalize(v, eps=1e-12):
    return v / (jnp.sqrt(jnp.sum(v * v)) + eps)


def spectral_normalize(weight, u0, n_iter=1):
    """PyTorch-style spectral_norm: weight (C_out, C_in, kh, kw) -> W / sigma."""
    c_out = weight.shape[0]
    w_mat = weight.reshape(c_out, -1)                      # (C_out, K)
    u = _l2_normalize(u0)
    v = None
    for _ in range(n_iter):
        v = _l2_normalize(w_mat.T @ u)
        u = _l2_normalize(w_mat @ v)
    sigma = u @ (w_mat @ v)
    return weight / sigma


def im2col(x, kh, kw, stride, padding):
    """x: (N, C, H, W) -> patches (N*Ho*Wo, C*kh*kw), C-major then (kh, kw)."""
    n, c, h, w = x.shape
    xp = jnp.pad(x, ((0, 0), (0, 0), (padding, padding), (padding, padding)))
    h_out = (h + 2 * padding - kh) // stride + 1
    w_out = (w + 2 * padding - kw) // stride + 1
    cols = []
    for ki in range(kh):
        for kj in range(kw):
            sl = xp[:, :,
                    ki: ki + (h_out - 1) * stride + 1: stride,
                    kj: kj + (w_out - 1) * stride + 1: stride]   # (N, C, Ho, Wo)
            cols.append(sl)
    pat = jnp.stack(cols, axis=2)                       # (N, C, kh*kw, Ho, Wo)
    pat = pat.reshape(n, c * kh * kw, h_out, w_out)
    pat = pat.transpose(0, 2, 3, 1).reshape(n * h_out * w_out, c * kh * kw)
    return pat, h_out, w_out


@functools.partial(jax.jit, static_argnames=("stride", "padding"))
def sn_gated_conv2d_v0(x, w_conv, b_conv, u_conv, w_mask, b_mask, u_mask,
                       stride=1, padding=1):
    """Forward of SNGatedConv2dWithActivationV0. x: NCHW float32."""
    n = x.shape[0]
    c_out, _, kh, kw = w_conv.shape

    # Spectral norm (single forward; running BN stats and the power-iteration
    # u vectors are intentionally not updated -- one fresh-module forward).
    w_conv_sn = spectral_normalize(w_conv, u_conv)
    w_mask_sn = spectral_normalize(w_mask, u_mask)

    # im2col in bf16 (halves the HBM traffic of the dominant operand).
    # TODO(synk): build the (tm, K) patch strip in-kernel from an NHWC halo
    # block to remove the kh*kw HBM read amplification of im2col.
    patches, h_out, w_out = im2col(x.astype(jnp.bfloat16), kh, kw,
                                   stride, padding)            # (M, K) bf16
    m_real, k = patches.shape

    # Lane-dense output padding: C_out -> multiple of 128. K stays UN-padded
    # in HBM (Mosaic pads the contraction in VMEM).
    # TODO(synk): for very small C_out (8 here), fold 128/C_out spatial
    # positions into the lane dim instead of padding channels to 128.
    cp = _round_up(c_out, 128)
    # Tuned M tile: big tiles (~1024) reach ~85% of HBM roofline; clamp so
    # small problems don't pad M excessively.
    tm = min(1024, _round_up(m_real, 256))
    mp = _round_up(m_real, tm)

    patches_p = jnp.zeros((mp, k), jnp.bfloat16).at[:m_real].set(patches)

    wx = w_conv_sn.reshape(c_out, -1).T.astype(jnp.bfloat16)   # (K, C_out)
    wm = w_mask_sn.reshape(c_out, -1).T.astype(jnp.bfloat16)
    w_fused = (jnp.zeros((k, 2 * cp), jnp.bfloat16)
               .at[:, :c_out].set(wx)
               .at[:, cp:cp + c_out].set(wm))
    b_fused = (jnp.zeros((1, 2 * cp), jnp.float32)
               .at[0, :c_out].set(b_conv)
               .at[0, cp:cp + c_out].set(b_mask))

    # TODO(synk): for large K (e.g. C_in=256, 3x3) prefer a two-pass-over-y
    # form with a bf16 y intermediate instead of recomputing the matmul.
    out_flat = _gated_conv_bn_pallas(patches_p, w_fused, b_fused,
                                     m_real, tm=tm)            # (Mp, Cp) f32

    out = out_flat[:m_real, :c_out].reshape(n, h_out, w_out, c_out)
    return out.transpose(0, 3, 1, 2)                           # NCHW boundary


# ----------------------------------------------------------------------------
# Deterministic synthetic parameters + demo run.
# ----------------------------------------------------------------------------
if __name__ == "__main__":
    key = jax.random.PRNGKey(0)
    N, C_in, H, W = 2, 4, 16, 16
    C_out, K = 8, 3
    stride, padding = 1, 1

    keys = jax.random.split(key, 7)
    fan_in = C_in * K * K
    kaiming_std = (2.0 / fan_in) ** 0.5                        # kaiming_normal_
    w_conv = kaiming_std * jax.random.normal(keys[0], (C_out, C_in, K, K), jnp.float32)
    w_mask = kaiming_std * jax.random.normal(keys[1], (C_out, C_in, K, K), jnp.float32)
    # Conv2d bias default init: U(-1/sqrt(fan_in), 1/sqrt(fan_in))
    bound = 1.0 / (fan_in ** 0.5)
    b_conv = jax.random.uniform(keys[2], (C_out,), jnp.float32, -bound, bound)
    b_mask = jax.random.uniform(keys[3], (C_out,), jnp.float32, -bound, bound)
    # spectral_norm power-iteration vectors (deterministic synthetic init)
    u_conv = jax.random.normal(keys[4], (C_out,), jnp.float32)
    u_mask = jax.random.normal(keys[5], (C_out,), jnp.float32)

    x = jax.random.normal(keys[6], (N, C_in, H, W), jnp.float32)

    out = sn_gated_conv2d_v0(x, w_conv, b_conv, u_conv, w_mask, b_mask, u_mask,
                             stride=stride, padding=padding)
    jax.block_until_ready(out)
    assert out.shape == (N, C_out, H, W)
    print("KERNEL_OK")
</pallas_src>

<mosaic_0001>
module attributes {stable_mosaic.version = 11 : i64} {
  func.func @_gated_conv_stats_kernel(%arg0: i32, %arg1: memref<512x36xbf16, #tpu.memory_space<vmem>>, %arg2: memref<36x256xbf16, #tpu.memory_space<vmem>>, %arg3: memref<1x256xf32, #tpu.memory_space<vmem>>, %arg4: memref<1x8x128xf32, #tpu.memory_space<vmem>>) attributes {dimension_semantics = [#tpu.dimension_semantics<parallel>], iteration_bounds = array<i64: 1>, scalar_prefetch = 0 : i64, scratch_operands = 0 : i64, tpu.core_type = #tpu.core_type<tc>, window_params = [{transform_indices = @transform_0, window_bounds = array<i64: 512, 36>}, {pipeline_mode = #tpu.pipeline_mode<synchronous>, transform_indices = @transform_1, window_bounds = array<i64: 36, 256>}, {pipeline_mode = #tpu.pipeline_mode<synchronous>, transform_indices = @transform_2, window_bounds = array<i64: 1, 256>}, {transform_indices = @transform_3, window_bounds = array<i64: 1, 8, 128>}]} {
    %c0 = arith.constant 0 : index
    %c0_0 = arith.constant 0 : index
    %0 = vector.load %arg1[%c0, %c0_0] : memref<512x36xbf16, #tpu.memory_space<vmem>>, vector<512x36xbf16>
    %c0_1 = arith.constant 0 : index
    %c0_2 = arith.constant 0 : index
    %1 = vector.load %arg2[%c0_1, %c0_2] : memref<36x256xbf16, #tpu.memory_space<vmem>>, vector<36x256xbf16>
    %cst = arith.constant dense<0.000000e+00> : vector<512x256xf32>
    %2 = tpu.matmul %0, %1, %cst {dimension_numbers = #tpu.dot_dimension_numbers<[1], [0], [0], [1], [0, 0, 1, 1], [], []>} : vector<512x36xbf16>, vector<36x256xbf16>, vector<512x256xf32> -> vector<512x256xf32>
    %c0_3 = arith.constant 0 : index
    %c0_4 = arith.constant 0 : index
    %3 = vector.load %arg3[%c0_3, %c0_4] : memref<1x256xf32, #tpu.memory_space<vmem>>, vector<1x256xf32>
    %4 = vector.broadcast %3 : vector<1x256xf32> to vector<512x256xf32>
    %5 = arith.addf %2, %4 : vector<512x256xf32>
    %6 = vector.extract_strided_slice %5 {offsets = [0, 0], sizes = [512, 128], strides = [1, 1]} : vector<512x256xf32> to vector<512x128xf32>
    %7 = vector.extract_strided_slice %5 {offsets = [0, 128], sizes = [512, 128], strides = [1, 1]} : vector<512x256xf32> to vector<512x128xf32>
    %cst_5 = arith.constant 0.000000e+00 : f32
    %8 = vector.broadcast %cst_5 : f32 to vector<512x128xf32>
    %9 = arith.cmpf oge, %6, %8 : vector<512x128xf32>
    %cst_6 = arith.constant 2.000000e-01 : f32
    %10 = vector.broadcast %cst_6 : f32 to vector<512x128xf32>
    %11 = arith.mulf %10, %6 : vector<512x128xf32>
    %12 = arith.select %9, %6, %11 : vector<512x128xi1>, vector<512x128xf32>
    %cst_7 = arith.constant 0.000000e+00 : f32
    %13 = vector.broadcast %cst_7 : f32 to vector<512x128xf32>
    %14 = arith.subf %13, %7 : vector<512x128xf32>
    %15 = math.exp %14 : vector<512x128xf32>
    %cst_8 = arith.constant 1.000000e+00 : f32
    %16 = vector.broadcast %cst_8 : f32 to vector<512x128xf32>
    %17 = arith.addf %16, %15 : vector<512x128xf32>
    %cst_9 = arith.constant 1.000000e+00 : f32
    %18 = vector.broadcast %cst_9 : f32 to vector<512x128xf32>
    %19 = arith.divf %18, %17 : vector<512x128xf32>
    %20 = arith.mulf %12, %19 : vector<512x128xf32>
    %cst_10 = arith.constant dense<0.000000e+00> : vector<128xf32>
    %21 = vector.multi_reduction <add>, %20, %cst_10 [0] : vector<512x128xf32> to vector<128xf32>
    %22 = vector.shape_cast %21 : vector<128xf32> to vector<1x128xf32>
    %23 = arith.mulf %20, %20 : vector<512x128xf32>
    %cst_11 = arith.constant dense<0.000000e+00> : vector<128xf32>
    %24 = vector.multi_reduction <add>, %23, %cst_11 [0] : vector<512x128xf32> to vector<128xf32>
    %25 = vector.shape_cast %24 : vector<128xf32> to vector<1x128xf32>
    %26 = tpu.iota {dimensions = array<i32: 0>} : vector<8x128xi32>
    %c0_i32 = arith.constant 0 : i32
    %27 = vector.broadcast %c0_i32 : i32 to vector<8x128xi32>
    %28 = arith.cmpi eq, %26, %27 : vector<8x128xi32>
    %cst_12 = arith.constant 0.000000e+00 : f32
    %29 = vector.shape_cast %22 : vector<1x128xf32> to vector<1x128xf32>
    %30 = vector.broadcast %29 : vector<1x128xf32> to vector<8x128xf32>
    %31 = vector.broadcast %cst_12 : f32 to vector<8x128xf32>
    %32 = arith.select %28, %30, %31 : vector<8x128xi1>, vector<8x128xf32>
    %c1_i32 = arith.constant 1 : i32
    %33 = vector.broadcast %c1_i32 : i32 to vector<8x128xi32>
    %34 = arith.cmpi eq, %26, %33 : vector<8x128xi32>
    %cst_13 = arith.constant 0.000000e+00 : f32
    %35 = vector.shape_cast %25 : vector<1x128xf32> to vector<1x128xf32>
    %36 = vector.broadcast %35 : vector<1x128xf32> to vector<8x128xf32>
    %37 = vector.broadcast %cst_13 : f32 to vector<8x128xf32>
    %38 = arith.select %34, %36, %37 : vector<8x128xi1>, vector<8x128xf32>
    %39 = arith.addf %32, %38 : vector<8x128xf32>
    %40 = vector.shape_cast %39 : vector<8x128xf32> to vector<1x8x128xf32>
    %c0_14 = arith.constant 0 : index
    %c0_15 = arith.constant 0 : index
    %c0_16 = arith.constant 0 : index
    %41 = vector.load %arg4[%c0_14, %c0_15, %c0_16] : memref<1x8x128xf32, #tpu.memory_space<vmem>>, vector<1x8x128xf32>
    tpu.vector_store %arg4[%c0_14, %c0_15, %c0_16], %40 {strides = array<i32>} : memref<1x8x128xf32, #tpu.memory_space<vmem>>, vector<1x8x128xf32>,
    return
  }
  func.func @transform_0(%arg0: i32) -> (i32, i32) {
    %c0_i32 = arith.constant 0 : i32
    %c0_i32_0 = arith.constant 0 : i32
    return %arg0, %c0_i32 : i32, i32
  }
  func.func @transform_1(%arg0: i32) -> (i32, i32) {
    %c0_i32 = arith.constant 0 : i32
    %c0_i32_0 = arith.constant 0 : i32
    %c0_i32_1 = arith.constant 0 : i32
    return %c0_i32, %c0_i32_0 : i32, i32
  }
  func.func @transform_2(%arg0: i32) -> (i32, i32) {
    %c0_i32 = arith.constant 0 : i32
    %c0_i32_0 = arith.constant 0 : i32
    %c0_i32_1 = arith.constant 0 : i32
    return %c0_i32, %c0_i32_0 : i32, i32
  }
  func.func @transform_3(%arg0: i32) -> (i32, i32, i32) {
    %c0_i32 = arith.constant 0 : i32
    %c0_i32_0 = arith.constant 0 : i32
    %c0_i32_1 = arith.constant 0 : i32
    return %arg0, %c0_i32, %c0_i32_0 : i32, i32, i32
  }
}

module attributes {stable_mosaic.version = 11 : i64} {
  func.func @_gated_conv_bn_apply_kernel(%arg0: i32, %arg1: memref<512x36xbf16, #tpu.memory_space<vmem>>, %arg2: memref<36x256xbf16, #tpu.memory_space<vmem>>, %arg3: memref<1x256xf32, #tpu.memory_space<vmem>>, %arg4: memref<1x128xf32, #tpu.memory_space<vmem>>, %arg5: memref<1x128xf32, #tpu.memory_space<vmem>>, %arg6: memref<512x128xf32, #tpu.memory_space<vmem>>) attributes {dimension_semantics = [#tpu.dimension_semantics<parallel>], iteration_bounds = array<i64: 1>, scalar_prefetch = 0 : i64, scratch_operands = 0 : i64, tpu.core_type = #tpu.core_type<tc>, window_params = [{transform_indices = @transform_0, window_bounds = array<i64: 512, 36>}, {pipeline_mode = #tpu.pipeline_mode<synchronous>, transform_indices = @transform_1, window_bounds = array<i64: 36, 256>}, {pipeline_mode = #tpu.pipeline_mode<synchronous>, transform_indices = @transform_2, window_bounds = array<i64: 1, 256>}, {pipeline_mode = #tpu.pipeline_mode<synchronous>, transform_indices = @transform_3, window_bounds = array<i64: 1, 128>}, {pipeline_mode = #tpu.pipeline_mode<synchronous>, transform_indices = @transform_4, window_bounds = array<i64: 1, 128>}, {transform_indices = @transform_5, window_bounds = array<i64: 512, 128>}]} {
    %c0 = arith.constant 0 : index
    %c0_0 = arith.constant 0 : index
    %0 = vector.load %arg1[%c0, %c0_0] : memref<512x36xbf16, #tpu.memory_space<vmem>>, vector<512x36xbf16>
    %c0_1 = arith.constant 0 : index
    %c0_2 = arith.constant 0 : index
    %1 = vector.load %arg2[%c0_1, %c0_2] : memref<36x256xbf16, #tpu.memory_space<vmem>>, vector<36x256xbf16>
    %cst = arith.constant dense<0.000000e+00> : vector<512x256xf32>
    %2 = tpu.matmul %0, %1, %cst {dimension_numbers = #tpu.dot_dimension_numbers<[1], [0], [0], [1], [0, 0, 1, 1], [], []>} : vector<512x36xbf16>, vector<36x256xbf16>, vector<512x256xf32> -> vector<512x256xf32>
    %c0_3 = arith.constant 0 : index
    %c0_4 = arith.constant 0 : index
    %3 = vector.load %arg3[%c0_3, %c0_4] : memref<1x256xf32, #tpu.memory_space<vmem>>, vector<1x256xf32>
    %4 = vector.broadcast %3 : vector<1x256xf32> to vector<512x256xf32>
    %5 = arith.addf %2, %4 : vector<512x256xf32>
    %6 = vector.extract_strided_slice %5 {offsets = [0, 0], sizes = [512, 128], strides = [1, 1]} : vector<512x256xf32> to vector<512x128xf32>
    %7 = vector.extract_strided_slice %5 {offsets = [0, 128], sizes = [512, 128], strides = [1, 1]} : vector<512x256xf32> to vector<512x128xf32>
    %cst_5 = arith.constant 0.000000e+00 : f32
    %8 = vector.broadcast %cst_5 : f32 to vector<512x128xf32>
    %9 = arith.cmpf oge, %6, %8 : vector<512x128xf32>
    %cst_6 = arith.constant 2.000000e-01 : f32
    %10 = vector.broadcast %cst_6 : f32 to vector<512x128xf32>
    %11 = arith.mulf %10, %6 : vector<512x128xf32>
    %12 = arith.select %9, %6, %11 : vector<512x128xi1>, vector<512x128xf32>
    %cst_7 = arith.constant 0.000000e+00 : f32
    %13 = vector.broadcast %cst_7 : f32 to vector<512x128xf32>
    %14 = arith.subf %13, %7 : vector<512x128xf32>
    %15 = math.exp %14 : vector<512x128xf32>
    %cst_8 = arith.constant 1.000000e+00 : f32
    %16 = vector.broadcast %cst_8 : f32 to vector<512x128xf32>
    %17 = arith.addf %16, %15 : vector<512x128xf32>
    %cst_9 = arith.constant 1.000000e+00 : f32
    %18 = vector.broadcast %cst_9 : f32 to vector<512x128xf32>
    %19 = arith.divf %18, %17 : vector<512x128xf32>
    %20 = arith.mulf %12, %19 : vector<512x128xf32>
    %c0_10 = arith.constant 0 : index
    %c0_11 = arith.constant 0 : index
    %21 = vector.load %arg4[%c0_10, %c0_11] : memref<1x128xf32, #tpu.memory_space<vmem>>, vector<1x128xf32>
    %22 = vector.broadcast %21 : vector<1x128xf32> to vector<512x128xf32>
    %23 = arith.subf %20, %22 : vector<512x128xf32>
    %c0_12 = arith.constant 0 : index
    %c0_13 = arith.constant 0 : index
    %24 = vector.load %arg5[%c0_12, %c0_13] : memref<1x128xf32, #tpu.memory_space<vmem>>, vector<1x128xf32>
    %25 = vector.broadcast %24 : vector<1x128xf32> to vector<512x128xf32>
    %26 = arith.mulf %23, %25 : vector<512x128xf32>
    %c0_14 = arith.constant 0 : index
    %c0_15 = arith.constant 0 : index
    %27 = vector.load %arg6[%c0_14, %c0_15] : memref<512x128xf32, #tpu.memory_space<vmem>>, vector<512x128xf32>
    tpu.vector_store %arg6[%c0_14, %c0_15], %26 {strides = array<i32>} : memref<512x128xf32, #tpu.memory_space<vmem>>, vector<512x128xf32>,
    return
  }
  func.func @transform_0(%arg0: i32) -> (i32, i32) {
    %c0_i32 = arith.constant 0 : i32
    %c0_i32_0 = arith.constant 0 : i32
    return %arg0, %c0_i32 : i32, i32
  }
  func.func @transform_1(%arg0: i32) -> (i32, i32) {
    %c0_i32 = arith.constant 0 : i32
    %c0_i32_0 = arith.constant 0 : i32
    %c0_i32_1 = arith.constant 0 : i32
    return %c0_i32, %c0_i32_0 : i32, i32
  }
  func.func @transform_2(%arg0: i32) -> (i32, i32) {
    %c0_i32 = arith.constant 0 : i32
    %c0_i32_0 = arith.constant 0 : i32
    %c0_i32_1 = arith.constant 0 : i32
    return %c0_i32, %c0_i32_0 : i32, i32
  }
  func.func @transform_3(%arg0: i32) -> (i32, i32) {
    %c0_i32 = arith.constant 0 : i32
    %c0_i32_0 = arith.constant 0 : i32
    %c0_i32_1 = arith.constant 0 : i32
    return %c0_i32, %c0_i32_0 : i32, i32
  }
  func.func @transform_4(%arg0: i32) -> (i32, i32) {
    %c0_i32 = arith.constant 0 : i32
    %c0_i32_0 = arith.constant 0 : i32
    %c0_i32_1 = arith.constant 0 : i32
    return %c0_i32, %c0_i32_0 : i32, i32
  }
  func.func @transform_5(%arg0: i32) -> (i32, i32) {
    %c0_i32 = arith.constant 0 : i32
    %c0_i32_0 = arith.constant 0 : i32
    return %arg0, %c0_i32 : i32, i32
  }
}

</mosaic_0001>

<llo_original>
// kernel: sn_gated_conv2d_v0.2
$region0: #{sn_gated_conv2d_v0.2}
  #allocation0 [shape = 'u32[]', space=smem, size = 0x4, offset = 0x4, fixed_abs, tag = 'smem constant byte address 0x4 - core index']
  #allocation1 [shape = 'u32[144,128]{1,0:T(1,128)}', space=vmem, size = 0x12000, scoped, tag = 'internal scratch']
  %s0 = inlined_call_operand.vmem [shape: bf16[512,36], index: 0, kind: input, shape index: {}]
  %s1 = inlined_call_operand.vmem [shape: bf16[36,256], index: 1, kind: input, shape index: {}]
  %s2 = inlined_call_operand.vmem [shape: f32[1,256], index: 2, kind: input, shape index: {}]
  %s3 = inlined_call_operand.vmem [shape: f32[1,8,128], index: 3, kind: output, shape index: {}]
  %s4 = sld [smem:[#allocation0]]
  $region22: #{sn_gated_conv2d_v0.2} parent=0
    _
  %s6 = ssub.s32 1, %s4
  %s7 = scalar_select 0, %s6, %s4
  // Predicated region
  $region2: #{sn_gated_conv2d_v0.2} parent=0 // pred_check
    _
  $region3: #{sn_gated_conv2d_v0.2} parent=0 // pred_check_branch
    %9 = sbr.rel (0) target = $region5
  $region4: #{sn_gated_conv2d_v0.2} parent=0 // pred_region
    _
  $region5: #{sn_gated_conv2d_v0.2} parent=0 // pred_fallthru
    _
  // Predicated region
  $region6: #{sn_gated_conv2d_v0.2} parent=0 // pred_check
    _
  $region7: #{sn_gated_conv2d_v0.2} parent=0 // pred_check_branch
    %11 = sbr.rel (0) target = $region9
  $region8: #{sn_gated_conv2d_v0.2} parent=0 // pred_region
    _
  $region9: #{sn_gated_conv2d_v0.2} parent=0 // pred_fallthru
    _
  // Predicated region
  $region10: #{sn_gated_conv2d_v0.2} parent=0 // pred_check
    _
  $region11: #{sn_gated_conv2d_v0.2} parent=0 // pred_check_branch
    %13 = sbr.rel (0) target = $region13
  $region12: #{sn_gated_conv2d_v0.2} parent=0 // pred_region
    _
  $region13: #{sn_gated_conv2d_v0.2} parent=0 // pred_fallthru
    _
  %v15 = vld [vmem:[%s0] sm:$0xf]
  %v16 = vld [vmem:[%s0 + $0x4] sm:$0xf]
  %v17 = vld [vmem:[%s0 + $0x8] sm:$0xf]
  %v18 = vld [vmem:[%s0 + $0xc] sm:$0xf]
  %v19 = vld [vmem:[%s0 + $0x10] sm:$0xf]
  %v20 = vld [vmem:[%s0 + $0x14] sm:$0xf]
  %v21 = vld [vmem:[%s0 + $0x18] sm:$0xf]
  %v22 = vld [vmem:[%s0 + $0x1c] sm:$0xf]
  %v23 = vld [vmem:[%s0 + $0x20] sm:$0xf]
  %v24 = vld [vmem:[%s0 + $0x24] sm:$0xf]
  %v25 = vld [vmem:[%s0 + $0x28] sm:$0xf]
  %v26 = vld [vmem:[%s0 + $0x2c] sm:$0xf]
  %v27 = vld [vmem:[%s0 + $0x30] sm:$0xf]
  %v28 = vld [vmem:[%s0 + $0x34] sm:$0xf]
  %v29 = vld [vmem:[%s0 + $0x38] sm:$0xf]
  %v30 = vld [vmem:[%s0 + $0x3c] sm:$0xf]
  %v31 = vld [vmem:[%s0 + $0x40] sm:$0xf]
  %v32 = vld [vmem:[%s0 + $0x44] sm:$0xf]
  %v33 = vld [vmem:[%s0 + $0x48] sm:$0xf]
  %v34 = vld [vmem:[%s0 + $0x4c] sm:$0xf]
  %v35 = vld [vmem:[%s0 + $0x50] sm:$0xf]
  %v36 = vld [vmem:[%s0 + $0x54] sm:$0xf]
  %v37 = vld [vmem:[%s0 + $0x58] sm:$0xf]
  %v38 = vld [vmem:[%s0 + $0x5c] sm:$0xf]
  %v39 = vld [vmem:[%s0 + $0x60] sm:$0xf]
  %v40 = vld [vmem:[%s0 + $0x64] sm:$0xf]
  %v41 = vld [vmem:[%s0 + $0x68] sm:$0xf]
  %v42 = vld [vmem:[%s0 + $0x6c] sm:$0xf]
  %v43 = vld [vmem:[%s0 + $0x70] sm:$0xf]
  %v44 = vld [vmem:[%s0 + $0x74] sm:$0xf]
  %v45 = vld [vmem:[%s0 + $0x78] sm:$0xf]
  %v46 = vld [vmem:[%s0 + $0x7c] sm:$0xf]
  %v47 = vld [vmem:[%s0 + $0x80] sm:$0xf]
  %v48 = vld [vmem:[%s0 + $0x84] sm:$0xf]
  %v49 = vld [vmem:[%s0 + $0x88] sm:$0xf]
  %v50 = vld [vmem:[%s0 + $0x8c] sm:$0xf]
  %v51 = vld [vmem:[%s0 + $0x90] sm:$0xf]
  %v52 = vld [vmem:[%s0 + $0x94] sm:$0xf]
  %v53 = vld [vmem:[%s0 + $0x98] sm:$0xf]
  %v54 = vld [vmem:[%s0 + $0x9c] sm:$0xf]
  %v55 = vld [vmem:[%s0 + $0xa0] sm:$0xf]
  %v56 = vld [vmem:[%s0 + $0xa4] sm:$0xf]
  %v57 = vld [vmem:[%s0 + $0xa8] sm:$0xf]
  %v58 = vld [vmem:[%s0 + $0xac] sm:$0xf]
  %v59 = vld [vmem:[%s0 + $0xb0] sm:$0xf]
  %v60 = vld [vmem:[%s0 + $0xb4] sm:$0xf]
  %v61 = vld [vmem:[%s0 + $0xb8] sm:$0xf]
  %v62 = vld [vmem:[%s0 + $0xbc] sm:$0xf]
  %v63 = vld [vmem:[%s0 + $0xc0] sm:$0xf]
  %v64 = vld [vmem:[%s0 + $0xc4] sm:$0xf]
  %v65 = vld [vmem:[%s0 + $0xc8] sm:$0xf]
  %v66 = vld [vmem:[%s0 + $0xcc] sm:$0xf]
  %v67 = vld [vmem:[%s0 + $0xd0] sm:$0xf]
  %v68 = vld [vmem:[%s0 + $0xd4] sm:$0xf]
  %v69 = vld [vmem:[%s0 + $0xd8] sm:$0xf]
  %v70 = vld [vmem:[%s0 + $0xdc] sm:$0xf]
  %v71 = vld [vmem:[%s0 + $0xe0] sm:$0xf]
  %v72 = vld [vmem:[%s0 + $0xe4] sm:$0xf]
  %v73 = vld [vmem:[%s0 + $0xe8] sm:$0xf]
  %v74 = vld [vmem:[%s0 + $0xec] sm:$0xf]
  %v75 = vld [vmem:[%s0 + $0xf0] sm:$0xf]
  %v76 = vld [vmem:[%s0 + $0xf4] sm:$0xf]
  %v77 = vld [vmem:[%s0 + $0xf8] sm:$0xf]
  %v78 = vld [vmem:[%s0 + $0xfc] sm:$0xf]
  %v79 = vld [vmem:[%s1] sm:$0xff]
  %v80 = vld [vmem:[%s1 + $0x8] sm:$0xff]
  %v81 = vld [vmem:[%s1 + $0x10] sm:$0xff]
  %v82 = vld [vmem:[%s1 + $0x18] sm:$0xff]
  %v83 = vld [vmem:[%s1 + $0x20] sm:$0x33]
  %v84 = vld [vmem:[%s2] sm:$0x3]
  %v86 = vlaneseq
  %v87 = vshrl.u32 %v86, 7
  %v88 = vsub.s32 0, %v87
  %v89 = vrot.slane %v84, %v88
  %v90 = vlaneseq
  %v91 = vshrl.u32 %v90, 7
  %v92 = vsub.s32 1, %v91
  %v93 = vrot.slane %v84, %v92
  %v160 = vunpack.c.l.b16 %v15
  %v161 = vunpack.c.l.b16 %v16
  %v162 = vunpack.c.l.b16 %v17
  %v163 = vunpack.c.l.b16 %v18
  %v164 = vunpack.c.l.b16 %v19
  %v165 = vunpack.c.l.b16 %v20
  %v166 = vunpack.c.l.b16 %v21
  %v167 = vunpack.c.l.b16 %v22
  %v168 = vunpack.c.l.b16 %v23
  %v169 = vunpack.c.l.b16 %v24
  %v170 = vunpack.c.l.b16 %v25
  %v171 = vunpack.c.l.b16 %v26
  %v172 = vunpack.c.l.b16 %v27
  %v173 = vunpack.c.l.b16 %v28
  %v174 = vunpack.c.l.b16 %v29
  %v175 = vunpack.c.l.b16 %v30
  %v176 = vunpack.c.l.b16 %v31
  %v177 = vunpack.c.l.b16 %v32
  %v178 = vunpack.c.l.b16 %v33
  %v179 = vunpack.c.l.b16 %v34
  %v180 = vunpack.c.l.b16 %v35
  %v181 = vunpack.c.l.b16 %v36
  %v182 = vunpack.c.l.b16 %v37
  %v183 = vunpack.c.l.b16 %v38
  %v184 = vunpack.c.l.b16 %v39
  %v185 = vunpack.c.l.b16 %v40
  %v186 = vunpack.c.l.b16 %v41
  %v187 = vunpack.c.l.b16 %v42
  %v188 = vunpack.c.l.b16 %v43
  %v189 = vunpack.c.l.b16 %v44
  %v190 = vunpack.c.l.b16 %v45
  %v191 = vunpack.c.l.b16 %v46
  %v192 = vunpack.c.l.b16 %v47
  %v193 = vunpack.c.l.b16 %v48
  %v194 = vunpack.c.l.b16 %v49
  %v195 = vunpack.c.l.b16 %v50
  %v196 = vunpack.c.l.b16 %v51
  %v197 = vunpack.c.l.b16 %v52
  %v198 = vunpack.c.l.b16 %v53
  %v199 = vunpack.c.l.b16 %v54
  %v200 = vunpack.c.l.b16 %v55
  %v201 = vunpack.c.l.b16 %v56
  %v202 = vunpack.c.l.b16 %v57
  %v203 = vunpack.c.l.b16 %v58
  %v204 = vunpack.c.l.b16 %v59
  %v205 = vunpack.c.l.b16 %v60
  %v206 = vunpack.c.l.b16 %v61
  %v207 = vunpack.c.l.b16 %v62
  %v208 = vunpack.c.l.b16 %v63
  %v209 = vunpack.c.l.b16 %v64
  %v210 = vunpack.c.l.b16 %v65
  %v211 = vunpack.c.l.b16 %v66
  %v212 = vunpack.c.l.b16 %v67
  %v213 = vunpack.c.l.b16 %v68
  %v214 = vunpack.c.l.b16 %v69
  %v215 = vunpack.c.l.b16 %v70
  %v216 = vunpack.c.l.b16 %v71
  %v217 = vunpack.c.l.b16 %v72
  %v218 = vunpack.c.l.b16 %v73
  %v219 = vunpack.c.l.b16 %v74
  %v220 = vunpack.c.l.b16 %v75
  %v221 = vunpack.c.l.b16 %v76
  %v222 = vunpack.c.l.b16 %v77
  %v223 = vunpack.c.l.b16 %v78
  %v224 = vpack.c.b16 %v161, %v160
  %v225 = vpack.c.b16 %v163, %v162
  %v226 = vpack.c.b16 %v165, %v164
  %v227 = vpack.c.b16 %v167, %v166
  %v228 = vpack.c.b16 %v169, %v168
  %v229 = vpack.c.b16 %v171, %v170
  %v230 = vpack.c.b16 %v173, %v172
  %v231 = vpack.c.b16 %v175, %v174
  %v232 = vpack.c.b16 %v177, %v176
  %v233 = vpack.c.b16 %v179, %v178
  %v234 = vpack.c.b16 %v181, %v180
  %v235 = vpack.c.b16 %v183, %v182
  %v236 = vpack.c.b16 %v185, %v184
  %v237 = vpack.c.b16 %v187, %v186
  %v238 = vpack.c.b16 %v189, %v188
  %v239 = vpack.c.b16 %v191, %v190
  %v240 = vpack.c.b16 %v193, %v192
  %v241 = vpack.c.b16 %v195, %v194
  %v242 = vpack.c.b16 %v197, %v196
  %v243 = vpack.c.b16 %v199, %v198
  %v244 = vpack.c.b16 %v201, %v200
  %v245 = vpack.c.b16 %v203, %v202
  %v246 = vpack.c.b16 %v205, %v204
  %v247 = vpack.c.b16 %v207, %v206
  %v248 = vpack.c.b16 %v209, %v208
  %v249 = vpack.c.b16 %v211, %v210
  %v250 = vpack.c.b16 %v213, %v212
  %v251 = vpack.c.b16 %v215, %v214
  %v252 = vpack.c.b16 %v217, %v216
  %v253 = vpack.c.b16 %v219, %v218
  %v254 = vpack.c.b16 %v221, %v220
  %v255 = vpack.c.b16 %v223, %v222
  %v261 = vunpack.c.l.b16 %v79
  %v262 = vunpack.c.h.b16 %v79
  %v263 = vunpack.c.l.b16 %v80
  %v264 = vunpack.c.h.b16 %v80
  %v265 = vunpack.c.l.b16 %v81
  %v266 = vunpack.c.h.b16 %v81
  %v267 = vunpack.c.l.b16 %v82
  %v268 = vunpack.c.h.b16 %v82
  %v269 = vunpack.c.l.b16 %v83
  %v270 = vunpack.c.h.b16 %v83
  %v271 = vpack.c.b16 %v263, %v261
  %v272 = vpack.c.b16 %v264, %v262
  %v273 = vpack.c.b16 %v267, %v265
  %v274 = vpack.c.b16 %v268, %v266
  %v275 = vpack.c.b16 %v269, %v269
  %v276 = vpack.c.b16 %v270, %v270
  %vm281 = vcmask 293888
  %v283 = vsel %vm281, %v224, 0
  %v286 = vsel %vm281, %v225, 0
  %v289 = vsel %vm281, %v226, 0
  %v292 = vsel %vm281, %v227, 0
  %v295 = vsel %vm281, %v228, 0
  %v298 = vsel %vm281, %v229, 0
  %v301 = vsel %vm281, %v230, 0
  %v304 = vsel %vm281, %v231, 0
  %v307 = vsel %vm281, %v232, 0
  %v310 = vsel %vm281, %v233, 0
  %v313 = vsel %vm281, %v234, 0
  %v316 = vsel %vm281, %v235, 0
  %v319 = vsel %vm281, %v236, 0
  %v322 = vsel %vm281, %v237, 0
  %v325 = vsel %vm281, %v238, 0
  %v328 = vsel %vm281, %v239, 0
  %v331 = vsel %vm281, %v240, 0
  %v334 = vsel %vm281, %v241, 0
  %v337 = vsel %vm281, %v242, 0
  %v340 = vsel %vm281, %v243, 0
  %v343 = vsel %vm281, %v244, 0
  %v346 = vsel %vm281, %v245, 0
  %v349 = vsel %vm281, %v246, 0
  %v352 = vsel %vm281, %v247, 0
  %v355 = vsel %vm281, %v248, 0
  %v358 = vsel %vm281, %v249, 0
  %v361 = vsel %vm281, %v250, 0
  %v364 = vsel %vm281, %v251, 0
  %v367 = vsel %vm281, %v252, 0
  %v370 = vsel %vm281, %v253, 0
  %v373 = vsel %vm281, %v254, 0
  %v376 = vsel %vm281, %v255, 0
  %vm378 = vcmask 1041408
  %v380 = vsel %vm378, %v275, 0
  %v383 = vsel %vm378, %v276, 0
  %385 = vmatprep.subr.bf16.mxu0 0
  %386 = vmatpush1.bf16.msra.mxu0 0
  %387 = vmatprep.subr.bf16.mxu0 0
  %388 = vmatpush1.bf16.msra.mxu0 0
  %389 = vmatprep.subr.bf16.mxu0 0
  %390 = vmatpush1.bf16.msra.mxu0 0
  %391 = vmatprep.subr.bf16.mxu0 0
  %392 = vmatpush1.bf16.msra.mxu0 0
  %393 = vmatprep.subr.bf16.mxu0 0
  %394 = vmatpush1.bf16.msra.mxu0 0
  %395 = vmatprep.subr.bf16.mxu0 %v383
  %396 = vmatpush1.bf16.msra.mxu0 %v380
  %397 = vmatprep.subr.bf16.mxu0 %v274
  %398 = vmatpush1.bf16.msra.mxu0 %v273
  %399 = vmatprep.subr.bf16.mxu0 %v272
  %400 = vmatpush1.bf16.msra.mxu0 %v271
  %401 = vmatprep.subr.bf16.mxu0 0
  %402 = vmatpush2.bf16.msra.mxu0 0
  %403 = vmatprep.subr.bf16.mxu0 0
  %404 = vmatpush2.bf16.msra.mxu0 0
  %405 = vmatprep.subr.bf16.mxu0 0
  %406 = vmatpush2.bf16.msra.mxu0 0
  %407 = vmatprep.subr.bf16.mxu0 0
  %408 = vmatpush2.bf16.msra.mxu0 0
  %409 = vmatprep.subr.bf16.mxu0 0
  %410 = vmatpush2.bf16.msra.mxu0 0
  %411 = vmatprep.subr.bf16.mxu0 0
  %412 = vmatpush2.bf16.msra.mxu0 0
  %413 = vmatprep.subr.bf16.mxu0 0
  %414 = vmatpush2.bf16.msra.mxu0 0
  %415 = vmatprep.subr.bf16.mxu0 0
  %416 = vmatpush2.bf16.msra.mxu0 0
  %417 = vmatprep.mubr.bf16.mxu0 0
  %418 = vmatmul.mubr.bf16.gmra.mxu0 %v283
  %v419 = vpop.f32.mrf.mxu0
  %v420 = vadd.f32 %v89, %v419
  %v421 = vpop.f32.mrf.mxu0
  %v422 = vadd.f32 %v93, %v421
  %v423 = vpop.f32.mrf.mxu0
  %v424 = vadd.f32 %v89, %v423
  %v425 = vpop.f32.mrf.mxu0
  %v426 = vadd.f32 %v93, %v425
  %427 = vmatprep.mubr.bf16.mxu0 0
  %428 = vmatmul.mubr.bf16.gmra.mxu0 %v286
  %v429 = vpop.f32.mrf.mxu0
  %v430 = vadd.f32 %v89, %v429
  %v431 = vpop.f32.mrf.mxu0
  %v432 = vadd.f32 %v93, %v431
  %v433 = vpop.f32.mrf.mxu0
  %v434 = vadd.f32 %v89, %v433
  %v435 = vpop.f32.mrf.mxu0
  %v436 = vadd.f32 %v93, %v435
  %437 = vmatprep.mubr.bf16.mxu0 0
  %438 = vmatmul.mubr.bf16.gmra.mxu0 %v289
  %v439 = vpop.f32.mrf.mxu0
  %v440 = vadd.f32 %v89, %v439
  %v441 = vpop.f32.mrf.mxu0
  %v442 = vadd.f32 %v93, %v441
  %v443 = vpop.f32.mrf.mxu0
  %v444 = vadd.f32 %v89, %v443
  %v445 = vpop.f32.mrf.mxu0
  %v446 = vadd.f32 %v93, %v445
  %447 = vmatprep.mubr.bf16.mxu0 0
  %448 = vmatmul.mubr.bf16.gmra.mxu0 %v292
  %v449 = vpop.f32.mrf.mxu0
  %v450 = vadd.f32 %v89, %v449
  %v451 = vpop.f32.mrf.mxu0
  %v452 = vadd.f32 %v93, %v451
  %v453 = vpop.f32.mrf.mxu0
  %v454 = vadd.f32 %v89, %v453
  %v455 = vpop.f32.mrf.mxu0
  %v456 = vadd.f32 %v93, %v455
  %457 = vmatprep.mubr.bf16.mxu0 0
  %458 = vmatmul.mubr.bf16.gmra.mxu0 %v295
  %v459 = vpop.f32.mrf.mxu0
  %v460 = vadd.f32 %v89, %v459
  %v461 = vpop.f32.mrf.mxu0
  %v462 = vadd.f32 %v93, %v461
  %v463 = vpop.f32.mrf.mxu0
  %v464 = vadd.f32 %v89, %v463
  %v465 = vpop.f32.mrf.mxu0
  %v466 = vadd.f32 %v93, %v465
  %467 = vmatprep.mubr.bf16.mxu0 0
  %468 = vmatmul.mubr.bf16.gmra.mxu0 %v298
  %v469 = vpop.f32.mrf.mxu0
  %v470 = vadd.f32 %v89, %v469
  %v471 = vpop.f32.mrf.mxu0
  %v472 = vadd.f32 %v93, %v471
  %v473 = vpop.f32.mrf.mxu0
  %v474 = vadd.f32 %v89, %v473
  %v475 = vpop.f32.mrf.mxu0
  %v476 = vadd.f32 %v93, %v475
  %477 = vmatprep.mubr.bf16.mxu0 0
  %478 = vmatmul.mubr.bf16.gmra.mxu0 %v301
  %v479 = vpop.f32.mrf.mxu0
  %v480 = vadd.f32 %v89, %v479
  %v481 = vpop.f32.mrf.mxu0
  %v482 = vadd.f32 %v93, %v481
  %v483 = vpop.f32.mrf.mxu0
  %v484 = vadd.f32 %v89, %v483
  %v485 = vpop.f32.mrf.mxu0
  %v486 = vadd.f32 %v93, %v485
  %487 = vmatprep.mubr.bf16.mxu0 0
  %488 = vmatmul.mubr.bf16.gmra.mxu0 %v304
  %v489 = vpop.f32.mrf.mxu0
  %v490 = vadd.f32 %v89, %v489
  %v491 = vpop.f32.mrf.mxu0
  %v492 = vadd.f32 %v93, %v491
  %v493 = vpop.f32.mrf.mxu0
  %v494 = vadd.f32 %v89, %v493
  %v495 = vpop.f32.mrf.mxu0
  %v496 = vadd.f32 %v93, %v495
  %497 = vmatprep.mubr.bf16.mxu0 0
  %498 = vmatmul.mubr.bf16.gmra.mxu0 %v307
  %v499 = vpop.f32.mrf.mxu0
  %v500 = vadd.f32 %v89, %v499
  %v501 = vpop.f32.mrf.mxu0
  %v502 = vadd.f32 %v93, %v501
  %v503 = vpop.f32.mrf.mxu0
  %v504 = vadd.f32 %v89, %v503
  %v505 = vpop.f32.mrf.mxu0
  %v506 = vadd.f32 %v93, %v505
  %507 = vmatprep.mubr.bf16.mxu0 0
  %508 = vmatmul.mubr.bf16.gmra.mxu0 %v310
  %v509 = vpop.f32.mrf.mxu0
  %v510 = vadd.f32 %v89, %v509
  %v511 = vpop.f32.mrf.mxu0
  %v512 = vadd.f32 %v93, %v511
  %v513 = vpop.f32.mrf.mxu0
  %v514 = vadd.f32 %v89, %v513
  %v515 = vpop.f32.mrf.mxu0
  %v516 = vadd.f32 %v93, %v515
  %517 = vmatprep.mubr.bf16.mxu0 0
  %518 = vmatmul.mubr.bf16.gmra.mxu0 %v313
  %v519 = vpop.f32.mrf.mxu0
  %v520 = vadd.f32 %v89, %v519
  %v521 = vpop.f32.mrf.mxu0
  %v522 = vadd.f32 %v93, %v521
  %v523 = vpop.f32.mrf.mxu0
  %v524 = vadd.f32 %v89, %v523
  %v525 = vpop.f32.mrf.mxu0
  %v526 = vadd.f32 %v93, %v525
  %527 = vmatprep.mubr.bf16.mxu0 0
  %528 = vmatmul.mubr.bf16.gmra.mxu0 %v316
  %v529 = vpop.f32.mrf.mxu0
  %v530 = vadd.f32 %v89, %v529
  %v531 = vpop.f32.mrf.mxu0
  %v532 = vadd.f32 %v93, %v531
  %v533 = vpop.f32.mrf.mxu0
  %v534 = vadd.f32 %v89, %v533
  %v535 = vpop.f32.mrf.mxu0
  %v536 = vadd.f32 %v93, %v535
  %537 = vmatprep.mubr.bf16.mxu0 0
  %538 = vmatmul.mubr.bf16.gmra.mxu0 %v319
  %v539 = vpop.f32.mrf.mxu0
  %v540 = vadd.f32 %v89, %v539
  %v541 = vpop.f32.mrf.mxu0
  %v542 = vadd.f32 %v93, %v541
  %v543 = vpop.f32.mrf.mxu0
  %v544 = vadd.f32 %v89, %v543
  %v545 = vpop.f32.mrf.mxu0
  %v546 = vadd.f32 %v93, %v545
  %547 = vmatprep.mubr.bf16.mxu0 0
  %548 = vmatmul.mubr.bf16.gmra.mxu0 %v322
  %v549 = vpop.f32.mrf.mxu0
  %v550 = vadd.f32 %v89, %v549
  %v551 = vpop.f32.mrf.mxu0
  %v552 = vadd.f32 %v93, %v551
  %v553 = vpop.f32.mrf.mxu0
  %v554 = vadd.f32 %v89, %v553
  %v555 = vpop.f32.mrf.mxu0
  %v556 = vadd.f32 %v93, %v555
  %557 = vmatprep.mubr.bf16.mxu0 0
  %558 = vmatmul.mubr.bf16.gmra.mxu0 %v325
  %v559 = vpop.f32.mrf.mxu0
  %v560 = vadd.f32 %v89, %v559
  %v561 = vpop.f32.mrf.mxu0
  %v562 = vadd.f32 %v93, %v561
  %v563 = vpop.f32.mrf.mxu0
  %v564 = vadd.f32 %v89, %v563
  %v565 = vpop.f32.mrf.mxu0
  %v566 = vadd.f32 %v93, %v565
  %567 = vmatprep.mubr.bf16.mxu0 0
  %568 = vmatmul.mubr.bf16.gmra.mxu0 %v328
  %v569 = vpop.f32.mrf.mxu0
  %v570 = vadd.f32 %v89, %v569
  %v571 = vpop.f32.mrf.mxu0
  %v572 = vadd.f32 %v93, %v571
  %v573 = vpop.f32.mrf.mxu0
  %v574 = vadd.f32 %v89, %v573
  %v575 = vpop.f32.mrf.mxu0
  %v576 = vadd.f32 %v93, %v575
  %577 = vmatprep.mubr.bf16.mxu0 0
  %578 = vmatmul.mubr.bf16.gmra.mxu0 %v331
  %v579 = vpop.f32.mrf.mxu0
  %v580 = vadd.f32 %v89, %v579
  %v581 = vpop.f32.mrf.mxu0
  %v582 = vadd.f32 %v93, %v581
  %v583 = vpop.f32.mrf.mxu0
  %v584 = vadd.f32 %v89, %v583
  %v585 = vpop.f32.mrf.mxu0
  %v586 = vadd.f32 %v93, %v585
  %587 = vmatprep.mubr.bf16.mxu0 0
  %588 = vmatmul.mubr.bf16.gmra.mxu0 %v334
  %v589 = vpop.f32.mrf.mxu0
  %v590 = vadd.f32 %v89, %v589
  %v591 = vpop.f32.mrf.mxu0
  %v592 = vadd.f32 %v93, %v591
  %v593 = vpop.f32.mrf.mxu0
  %v594 = vadd.f32 %v89, %v593
  %v595 = vpop.f32.mrf.mxu0
  %v596 = vadd.f32 %v93, %v595
  %597 = vmatprep.mubr.bf16.mxu0 0
  %598 = vmatmul.mubr.bf16.gmra.mxu0 %v337
  %v599 = vpop.f32.mrf.mxu0
  %v600 = vadd.f32 %v89, %v599
  %v601 = vpop.f32.mrf.mxu0
  %v602 = vadd.f32 %v93, %v601
  %v603 = vpop.f32.mrf.mxu0
  %v604 = vadd.f32 %v89, %v603
  %v605 = vpop.f32.mrf.mxu0
  %v606 = vadd.f32 %v93, %v605
  %607 = vmatprep.mubr.bf16.mxu0 0
  %608 = vmatmul.mubr.bf16.gmra.mxu0 %v340
  %v609 = vpop.f32.mrf.mxu0
  %v610 = vadd.f32 %v89, %v609
  %v611 = vpop.f32.mrf.mxu0
  %v612 = vadd.f32 %v93, %v611
  %v613 = vpop.f32.mrf.mxu0
  %v614 = vadd.f32 %v89, %v613
  %v615 = vpop.f32.mrf.mxu0
  %v616 = vadd.f32 %v93, %v615
  %617 = vmatprep.mubr.bf16.mxu0 0
  %618 = vmatmul.mubr.bf16.gmra.mxu0 %v343
  %v619 = vpop.f32.mrf.mxu0
  %v620 = vadd.f32 %v89, %v619
  %v621 = vpop.f32.mrf.mxu0
  %v622 = vadd.f32 %v93, %v621
  %v623 = vpop.f32.mrf.mxu0
  %v624 = vadd.f32 %v89, %v623
  %v625 = vpop.f32.mrf.mxu0
  %v626 = vadd.f32 %v93, %v625
  %627 = vmatprep.mubr.bf16.mxu0 0
  %628 = vmatmul.mubr.bf16.gmra.mxu0 %v346
  %v629 = vpop.f32.mrf.mxu0
  %v630 = vadd.f32 %v89, %v629
  %v631 = vpop.f32.mrf.mxu0
  %v632 = vadd.f32 %v93, %v631
  %v633 = vpop.f32.mrf.mxu0
  %v634 = vadd.f32 %v89, %v633
  %v635 = vpop.f32.mrf.mxu0
  %v636 = vadd.f32 %v93, %v635
  %637 = vmatprep.mubr.bf16.mxu0 0
  %638 = vmatmul.mubr.bf16.gmra.mxu0 %v349
  %v639 = vpop.f32.mrf.mxu0
  %v640 = vadd.f32 %v89, %v639
  %v641 = vpop.f32.mrf.mxu0
  %v642 = vadd.f32 %v93, %v641
  %v643 = vpop.f32.mrf.mxu0
  %v644 = vadd.f32 %v89, %v643
  %v645 = vpop.f32.mrf.mxu0
  %v646 = vadd.f32 %v93, %v645
  %647 = vmatprep.mubr.bf16.mxu0 0
  %648 = vmatmul.mubr.bf16.gmra.mxu0 %v352
  %v649 = vpop.f32.mrf.mxu0
  %v650 = vadd.f32 %v89, %v649
  %v651 = vpop.f32.mrf.mxu0
  %v652 = vadd.f32 %v93, %v651
  %v653 = vpop.f32.mrf.mxu0
  %v654 = vadd.f32 %v89, %v653
  %v655 = vpop.f32.mrf.mxu0
  %v656 = vadd.f32 %v93, %v655
  %657 = vmatprep.mubr.bf16.mxu0 0
  %658 = vmatmul.mubr.bf16.gmra.mxu0 %v355
  %v659 = vpop.f32.mrf.mxu0
  %v660 = vadd.f32 %v89, %v659
  %v661 = vpop.f32.mrf.mxu0
  %v662 = vadd.f32 %v93, %v661
  %v663 = vpop.f32.mrf.mxu0
  %v664 = vadd.f32 %v89, %v663
  %v665 = vpop.f32.mrf.mxu0
  %v666 = vadd.f32 %v93, %v665
  %667 = vmatprep.mubr.bf16.mxu0 0
  %668 = vmatmul.mubr.bf16.gmra.mxu0 %v358
  %v669 = vpop.f32.mrf.mxu0
  %v670 = vadd.f32 %v89, %v669
  %v671 = vpop.f32.mrf.mxu0
  %v672 = vadd.f32 %v93, %v671
  %v673 = vpop.f32.mrf.mxu0
  %v674 = vadd.f32 %v89, %v673
  %v675 = vpop.f32.mrf.mxu0
  %v676 = vadd.f32 %v93, %v675
  %677 = vmatprep.mubr.bf16.mxu0 0
  %678 = vmatmul.mubr.bf16.gmra.mxu0 %v361
  %v679 = vpop.f32.mrf.mxu0
  %v680 = vadd.f32 %v89, %v679
  %v681 = vpop.f32.mrf.mxu0
  %v682 = vadd.f32 %v93, %v681
  %v683 = vpop.f32.mrf.mxu0
  %v684 = vadd.f32 %v89, %v683
  %v685 = vpop.f32.mrf.mxu0
  %v686 = vadd.f32 %v93, %v685
  %687 = vmatprep.mubr.bf16.mxu0 0
  %688 = vmatmul.mubr.bf16.gmra.mxu0 %v364
  %v689 = vpop.f32.mrf.mxu0
  %v690 = vadd.f32 %v89, %v689
  %v691 = vpop.f32.mrf.mxu0
  %v692 = vadd.f32 %v93, %v691
  %v693 = vpop.f32.mrf.mxu0
  %v694 = vadd.f32 %v89, %v693
  %v695 = vpop.f32.mrf.mxu0
  %v696 = vadd.f32 %v93, %v695
  %697 = vmatprep.mubr.bf16.mxu0 0
  %698 = vmatmul.mubr.bf16.gmra.mxu0 %v367
  %v699 = vpop.f32.mrf.mxu0
  %v700 = vadd.f32 %v89, %v699
  %v701 = vpop.f32.mrf.mxu0
  %v702 = vadd.f32 %v93, %v701
  %v703 = vpop.f32.mrf.mxu0
  %v704 = vadd.f32 %v89, %v703
  %v705 = vpop.f32.mrf.mxu0
  %v706 = vadd.f32 %v93, %v705
  %707 = vmatprep.mubr.bf16.mxu0 0
  %708 = vmatmul.mubr.bf16.gmra.mxu0 %v370
  %v709 = vpop.f32.mrf.mxu0
  %v710 = vadd.f32 %v89, %v709
  %v711 = vpop.f32.mrf.mxu0
  %v712 = vadd.f32 %v93, %v711
  %v713 = vpop.f32.mrf.mxu0
  %v714 = vadd.f32 %v89, %v713
  %v715 = vpop.f32.mrf.mxu0
  %v716 = vadd.f32 %v93, %v715
  %717 = vmatprep.mubr.bf16.mxu0 0
  %718 = vmatmul.mubr.bf16.gmra.mxu0 %v373
  %v719 = vpop.f32.mrf.mxu0
  %v720 = vadd.f32 %v89, %v719
  %v721 = vpop.f32.mrf.mxu0
  %v722 = vadd.f32 %v93, %v721
  %v723 = vpop.f32.mrf.mxu0
  %v724 = vadd.f32 %v89, %v723
  %v725 = vpop.f32.mrf.mxu0
  %v726 = vadd.f32 %v93, %v725
  %727 = vmatprep.mubr.bf16.mxu0 0
  %728 = vmatmul.mubr.bf16.gmra.mxu0 %v376
  %v729 = vpop.f32.mrf.mxu0
  %v730 = vadd.f32 %v89, %v729
  %v731 = vpop.f32.mrf.mxu0
  %v732 = vadd.f32 %v93, %v731
  %v733 = vpop.f32.mrf.mxu0
  %v734 = vadd.f32 %v89, %v733
  %v735 = vpop.f32.mrf.mxu0
  %v736 = vadd.f32 %v93, %v735
  %737 = vdwg.mxu0
  %vm738 = vcmp.ge.f32.partialorder %v420, 0.0
  %vm739 = vcmp.ge.f32.partialorder %v424, 0.0
  %vm740 = vcmp.ge.f32.partialorder %v430, 0.0
  %vm741 = vcmp.ge.f32.partialorder %v434, 0.0
  %vm742 = vcmp.ge.f32.partialorder %v440, 0.0
  %vm743 = vcmp.ge.f32.partialorder %v444, 0.0
  %vm744 = vcmp.ge.f32.partialorder %v450, 0.0
  %vm745 = vcmp.ge.f32.partialorder %v454, 0.0
  %vm746 = vcmp.ge.f32.partialorder %v460, 0.0
  %vm747 = vcmp.ge.f32.partialorder %v464, 0.0
  %vm748 = vcmp.ge.f32.partialorder %v470, 0.0
  %vm749 = vcmp.ge.f32.partialorder %v474, 0.0
  %vm750 = vcmp.ge.f32.partialorder %v480, 0.0
  %vm751 = vcmp.ge.f32.partialorder %v484, 0.0
  %vm752 = vcmp.ge.f32.partialorder %v490, 0.0
  %vm753 = vcmp.ge.f32.partialorder %v494, 0.0
  %vm754 = vcmp.ge.f32.partialorder %v500, 0.0
  %vm755 = vcmp.ge.f32.partialorder %v504, 0.0
  %vm756 = vcmp.ge.f32.partialorder %v510, 0.0
  %vm757 = vcmp.ge.f32.partialorder %v514, 0.0
  %vm758 = vcmp.ge.f32.partialorder %v520, 0.0
  %vm759 = vcmp.ge.f32.partialorder %v524, 0.0
  %vm760 = vcmp.ge.f32.partialorder %v530, 0.0
  %vm761 = vcmp.ge.f32.partialorder %v534, 0.0
  %vm762 = vcmp.ge.f32.partialorder %v540, 0.0
  %vm763 = vcmp.ge.f32.partialorder %v544, 0.0
  %vm764 = vcmp.ge.f32.partialorder %v550, 0.0
  %vm765 = vcmp.ge.f32.partialorder %v554, 0.0
  %vm766 = vcmp.ge.f32.partialorder %v560, 0.0
  %vm767 = vcmp.ge.f32.partialorder %v564, 0.0
  %vm768 = vcmp.ge.f32.partialorder %v570, 0.0
  %vm769 = vcmp.ge.f32.partialorder %v574, 0.0
  %vm770 = vcmp.ge.f32.partialorder %v580, 0.0
  %vm771 = vcmp.ge.f32.partialorder %v584, 0.0
  %vm772 = vcmp.ge.f32.partialorder %v590, 0.0
  %vm773 = vcmp.ge.f32.partialorder %v594, 0.0
  %vm774 = vcmp.ge.f32.partialorder %v600, 0.0
  %vm775 = vcmp.ge.f32.partialorder %v604, 0.0
  %vm776 = vcmp.ge.f32.partialorder %v610, 0.0
  %vm777 = vcmp.ge.f32.partialorder %v614, 0.0
  %vm778 = vcmp.ge.f32.partialorder %v620, 0.0
  %vm779 = vcmp.ge.f32.partialorder %v624, 0.0
  %vm780 = vcmp.ge.f32.partialorder %v630, 0.0
  %vm781 = vcmp.ge.f32.partialorder %v634, 0.0
  %vm782 = vcmp.ge.f32.partialorder %v640, 0.0
  %vm783 = vcmp.ge.f32.partialorder %v644, 0.0
  %vm784 = vcmp.ge.f32.partialorder %v650, 0.0
  %vm785 = vcmp.ge.f32.partialorder %v654, 0.0
  %vm786 = vcmp.ge.f32.partialorder %v660, 0.0
  %vm787 = vcmp.ge.f32.partialorder %v664, 0.0
  %vm788 = vcmp.ge.f32.partialorder %v670, 0.0
  %vm789 = vcmp.ge.f32.partialorder %v674, 0.0
  %vm790 = vcmp.ge.f32.partialorder %v680, 0.0
  %vm791 = vcmp.ge.f32.partialorder %v684, 0.0
  %vm792 = vcmp.ge.f32.partialorder %v690, 0.0
  %vm793 = vcmp.ge.f32.partialorder %v694, 0.0
  %vm794 = vcmp.ge.f32.partialorder %v700, 0.0
  %vm795 = vcmp.ge.f32.partialorder %v704, 0.0
  %vm796 = vcmp.ge.f32.partialorder %v710, 0.0
  %vm797 = vcmp.ge.f32.partialorder %v714, 0.0
  %vm798 = vcmp.ge.f32.partialorder %v720, 0.0
  %vm799 = vcmp.ge.f32.partialorder %v724, 0.0
  %vm800 = vcmp.ge.f32.partialorder %v730, 0.0
  %vm801 = vcmp.ge.f32.partialorder %v734, 0.0
  %v802 = vmul.f32 %v420, 0.2
  %v803 = vmul.f32 %v424, 0.2
  %v804 = vmul.f32 %v430, 0.2
  %v805 = vmul.f32 %v434, 0.2
  %v806 = vmul.f32 %v440, 0.2
  %v807 = vmul.f32 %v444, 0.2
  %v808 = vmul.f32 %v450, 0.2
  %v809 = vmul.f32 %v454, 0.2
  %v810 = vmul.f32 %v460, 0.2
  %v811 = vmul.f32 %v464, 0.2
  %v812 = vmul.f32 %v470, 0.2
  %v813 = vmul.f32 %v474, 0.2
  %v814 = vmul.f32 %v480, 0.2
  %v815 = vmul.f32 %v484, 0.2
  %v816 = vmul.f32 %v490, 0.2
  %v817 = vmul.f32 %v494, 0.2
  %v818 = vmul.f32 %v500, 0.2
  %v819 = vmul.f32 %v504, 0.2
  %v820 = vmul.f32 %v510, 0.2
  %v821 = vmul.f32 %v514, 0.2
  %v822 = vmul.f32 %v520, 0.2
  %v823 = vmul.f32 %v524, 0.2
  %v824 = vmul.f32 %v530, 0.2
  %v825 = vmul.f32 %v534, 0.2
  %v826 = vmul.f32 %v540, 0.2
  %v827 = vmul.f32 %v544, 0.2
  %v828 = vmul.f32 %v550, 0.2
  %v829 = vmul.f32 %v554, 0.2
  %v830 = vmul.f32 %v560, 0.2
  %v831 = vmul.f32 %v564, 0.2
  %v832 = vmul.f32 %v570, 0.2
  %v833 = vmul.f32 %v574, 0.2
  %v834 = vmul.f32 %v580, 0.2
  %v835 = vmul.f32 %v584, 0.2
  %v836 = vmul.f32 %v590, 0.2
  %v837 = vmul.f32 %v594, 0.2
  %v838 = vmul.f32 %v600, 0.2
  %v839 = vmul.f32 %v604, 0.2
  %v840 = vmul.f32 %v610, 0.2
  %v841 = vmul.f32 %v614, 0.2
  %v842 = vmul.f32 %v620, 0.2
  %v843 = vmul.f32 %v624, 0.2
  %v844 = vmul.f32 %v630, 0.2
  %v845 = vmul.f32 %v634, 0.2
  %v846 = vmul.f32 %v640, 0.2
  %v847 = vmul.f32 %v644, 0.2
  %v848 = vmul.f32 %v650, 0.2
  %v849 = vmul.f32 %v654, 0.2
  %v850 = vmul.f32 %v660, 0.2
  %v851 = vmul.f32 %v664, 0.2
  %v852 = vmul.f32 %v670, 0.2
  %v853 = vmul.f32 %v674, 0.2
  %v854 = vmul.f32 %v680, 0.2
  %v855 = vmul.f32 %v684, 0.2
  %v856 = vmul.f32 %v690, 0.2
  %v857 = vmul.f32 %v694, 0.2
  %v858 = vmul.f32 %v700, 0.2
  %v859 = vmul.f32 %v704, 0.2
  %v860 = vmul.f32 %v710, 0.2
  %v861 = vmul.f32 %v714, 0.2
  %v862 = vmul.f32 %v720, 0.2
  %v863 = vmul.f32 %v724, 0.2
  %v864 = vmul.f32 %v730, 0.2
  %v865 = vmul.f32 %v734, 0.2
  %v866 = vsel %vm738, %v420, %v802
  %v867 = vsel %vm739, %v424, %v803
  %v868 = vsel %vm740, %v430, %v804
  %v869 = vsel %vm741, %v434, %v805
  %v870 = vsel %vm742, %v440, %v806
  %v871 = vsel %vm743, %v444, %v807
  %v872 = vsel %vm744, %v450, %v808
  %v873 = vsel %vm745, %v454, %v809
  %v874 = vsel %vm746, %v460, %v810
  %v875 = vsel %vm747, %v464, %v811
  %v876 = vsel %vm748, %v470, %v812
  %v877 = vsel %vm749, %v474, %v813
  %v878 = vsel %vm750, %v480, %v814
  %v879 = vsel %vm751, %v484, %v815
  %v880 = vsel %vm752, %v490, %v816
  %v881 = vsel %vm753, %v494, %v817
  %v882 = vsel %vm754, %v500, %v818
  %v883 = vsel %vm755, %v504, %v819
  %v884 = vsel %vm756, %v510, %v820
  %v885 = vsel %vm757, %v514, %v821
  %v886 = vsel %vm758, %v520, %v822
  %v887 = vsel %vm759, %v524, %v823
  %v888 = vsel %vm760, %v530, %v824
  %v889 = vsel %vm761, %v534, %v825
  %v890 = vsel %vm762, %v540, %v826
  %v891 = vsel %vm763, %v544, %v827
  %v892 = vsel %vm764, %v550, %v828
  %v893 = vsel %vm765, %v554, %v829
  %v894 = vsel %vm766, %v560, %v830
  %v895 = vsel %vm767, %v564, %v831
  %v896 = vsel %vm768, %v570, %v832
  %v897 = vsel %vm769, %v574, %v833
  %v898 = vsel %vm770, %v580, %v834
  %v899 = vsel %vm771, %v584, %v835
  %v900 = vsel %vm772, %v590, %v836
  %v901 = vsel %vm773, %v594, %v837
  %v902 = vsel %vm774, %v600, %v838
  %v903 = vsel %vm775, %v604, %v839
  %v904 = vsel %vm776, %v610, %v840
  %v905 = vsel %vm777, %v614, %v841
  %v906 = vsel %vm778, %v620, %v842
  %v907 = vsel %vm779, %v624, %v843
  %v908 = vsel %vm780, %v630, %v844
  %v909 = vsel %vm781, %v634, %v845
  %v910 = vsel %vm782, %v640, %v846
  %v911 = vsel %vm783, %v644, %v847
  %v912 = vsel %vm784, %v650, %v848
  %v913 = vsel %vm785, %v654, %v849
  %v914 = vsel %vm786, %v660, %v850
  %v915 = vsel %vm787, %v664, %v851
  %v916 = vsel %vm788, %v670, %v852
  %v917 = vsel %vm789, %v674, %v853
  %v918 = vsel %vm790, %v680, %v854
  %v919 = vsel %vm791, %v684, %v855
  %v920 = vsel %vm792, %v690, %v856
  %v921 = vsel %vm793, %v694, %v857
  %v922 = vsel %vm794, %v700, %v858
  %v923 = vsel %vm795, %v704, %v859
  %v924 = vsel %vm796, %v710, %v860
  %v925 = vsel %vm797, %v714, %v861
  %v926 = vsel %vm798, %v720, %v862
  %v927 = vsel %vm799, %v724, %v863
  %v928 = vsel %vm800, %v730, %v864
  %v929 = vsel %vm801, %v734, %v865
  %v930 = vsub.f32 0.0, %v422
  %v931 = vsub.f32 0.0, %v426
  %v932 = vsub.f32 0.0, %v432
  %v933 = vsub.f32 0.0, %v436
  %v934 = vsub.f32 0.0, %v442
  %v935 = vsub.f32 0.0, %v446
  %v936 = vsub.f32 0.0, %v452
  %v937 = vsub.f32 0.0, %v456
  %v938 = vsub.f32 0.0, %v462
  %v939 = vsub.f32 0.0, %v466
  %v940 = vsub.f32 0.0, %v472
  %v941 = vsub.f32 0.0, %v476
  %v942 = vsub.f32 0.0, %v482
  %v943 = vsub.f32 0.0, %v486
  %v944 = vsub.f32 0.0, %v492
  %v945 = vsub.f32 0.0, %v496
  %v946 = vsub.f32 0.0, %v502
  %v947 = vsub.f32 0.0, %v506
  %v948 = vsub.f32 0.0, %v512
  %v949 = vsub.f32 0.0, %v516
  %v950 = vsub.f32 0.0, %v522
  %v951 = vsub.f32 0.0, %v526
  %v952 = vsub.f32 0.0, %v532
  %v953 = vsub.f32 0.0, %v536
  %v954 = vsub.f32 0.0, %v542
  %v955 = vsub.f32 0.0, %v546
  %v956 = vsub.f32 0.0, %v552
  %v957 = vsub.f32 0.0, %v556
  %v958 = vsub.f32 0.0, %v562
  %v959 = vsub.f32 0.0, %v566
  %v960 = vsub.f32 0.0, %v572
  %v961 = vsub.f32 0.0, %v576
  %v962 = vsub.f32 0.0, %v582
  %v963 = vsub.f32 0.0, %v586
  %v964 = vsub.f32 0.0, %v592
  %v965 = vsub.f32 0.0, %v596
  %v966 = vsub.f32 0.0, %v602
  %v967 = vsub.f32 0.0, %v606
  %v968 = vsub.f32 0.0, %v612
  %v969 = vsub.f32 0.0, %v616
  %v970 = vsub.f32 0.0, %v622
  %v971 = vsub.f32 0.0, %v626
  %v972 = vsub.f32 0.0, %v632
  %v973 = vsub.f32 0.0, %v636
  %v974 = vsub.f32 0.0, %v642
  %v975 = vsub.f32 0.0, %v646
  %v976 = vsub.f32 0.0, %v652
  %v977 = vsub.f32 0.0, %v656
  %v978 = vsub.f32 0.0, %v662
  %v979 = vsub.f32 0.0, %v666
  %v980 = vsub.f32 0.0, %v672
  %v981 = vsub.f32 0.0, %v676
  %v982 = vsub.f32 0.0, %v682
  %v983 = vsub.f32 0.0, %v686
  %v984 = vsub.f32 0.0, %v692
  %v985 = vsub.f32 0.0, %v696
  %v986 = vsub.f32 0.0, %v702
  %v987 = vsub.f32 0.0, %v706
  %v988 = vsub.f32 0.0, %v712
  %v989 = vsub.f32 0.0, %v716
  %v990 = vsub.f32 0.0, %v722
  %v991 = vsub.f32 0.0, %v726
  %v992 = vsub.f32 0.0, %v732
  %v993 = vsub.f32 0.0, %v736
  %v994 = vmul.f32 %v930, 1.442695
  %v995 = vpow.pop %v994
  %v996 = vmul.f32 %v931, 1.442695
  %v997 = vpow.pop %v996
  %v998 = vmul.f32 %v932, 1.442695
  %v999 = vpow.pop %v998
  %v1000 = vmul.f32 %v933, 1.442695
  %v1001 = vpow.pop %v1000
  %v1002 = vmul.f32 %v934, 1.442695
  %v1003 = vpow.pop %v1002
  %v1004 = vmul.f32 %v935, 1.442695
  %v1005 = vpow.pop %v1004
  %v1006 = vmul.f32 %v936, 1.442695
  %v1007 = vpow.pop %v1006
  %v1008 = vmul.f32 %v937, 1.442695
  %v1009 = vpow.pop %v1008
  %v1010 = vmul.f32 %v938, 1.442695
  %v1011 = vpow.pop %v1010
  %v1012 = vmul.f32 %v939, 1.442695
  %v1013 = vpow.pop %v1012
  %v1014 = vmul.f32 %v940, 1.442695
  %v1015 = vpow.pop %v1014
  %v1016 = vmul.f32 %v941, 1.442695
  %v1017 = vpow.pop %v1016
  %v1018 = vmul.f32 %v942, 1.442695
  %v1019 = vpow.pop %v1018
  %v1020 = vmul.f32 %v943, 1.442695
  %v1021 = vpow.pop %v1020
  %v1022 = vmul.f32 %v944, 1.442695
  %v1023 = vpow.pop %v1022
  %v1024 = vmul.f32 %v945, 1.442695
  %v1025 = vpow.pop %v1024
  %v1026 = vmul.f32 %v946, 1.442695
  %v1027 = vpow.pop %v1026
  %v1028 = vmul.f32 %v947, 1.442695
  %v1029 = vpow.pop %v1028
  %v1030 = vmul.f32 %v948, 1.442695
  %v1031 = vpow.pop %v1030
  %v1032 = vmul.f32 %v949, 1.442695
  %v1033 = vpow.pop %v1032
  %v1034 = vmul.f32 %v950, 1.442695
  %v1035 = vpow.pop %v1034
  %v1036 = vmul.f32 %v951, 1.442695
  %v1037 = vpow.pop %v1036
  %v1038 = vmul.f32 %v952, 1.442695
  %v1039 = vpow.pop %v1038
  %v1040 = vmul.f32 %v953, 1.442695
  %v1041 = vpow.pop %v1040
  %v1042 = vmul.f32 %v954, 1.442695
  %v1043 = vpow.pop %v1042
  %v1044 = vmul.f32 %v955, 1.442695
  %v1045 = vpow.pop %v1044
  %v1046 = vmul.f32 %v956, 1.442695
  %v1047 = vpow.pop %v1046
  %v1048 = vmul.f32 %v957, 1.442695
  %v1049 = vpow.pop %v1048
  %v1050 = vmul.f32 %v958, 1.442695
  %v1051 = vpow.pop %v1050
  %v1052 = vmul.f32 %v959, 1.442695
  %v1053 = vpow.pop %v1052
  %v1054 = vmul.f32 %v960, 1.442695
  %v1055 = vpow.pop %v1054
  %v1056 = vmul.f32 %v961, 1.442695
  %v1057 = vpow.pop %v1056
  %v1058 = vmul.f32 %v962, 1.442695
  %v1059 = vpow.pop %v1058
  %v1060 = vmul.f32 %v963, 1.442695
  %v1061 = vpow.pop %v1060
  %v1062 = vmul.f32 %v964, 1.442695
  %v1063 = vpow.pop %v1062
  %v1064 = vmul.f32 %v965, 1.442695
  %v1065 = vpow.pop %v1064
  %v1066 = vmul.f32 %v966, 1.442695
  %v1067 = vpow.pop %v1066
  %v1068 = vmul.f32 %v967, 1.442695
  %v1069 = vpow.pop %v1068
  %v1070 = vmul.f32 %v968, 1.442695
  %v1071 = vpow.pop %v1070
  %v1072 = vmul.f32 %v969, 1.442695
  %v1073 = vpow.pop %v1072
  %v1074 = vmul.f32 %v970, 1.442695
  %v1075 = vpow.pop %v1074
  %v1076 = vmul.f32 %v971, 1.442695
  %v1077 = vpow.pop %v1076
  %v1078 = vmul.f32 %v972, 1.442695
  %v1079 = vpow.pop %v1078
  %v1080 = vmul.f32 %v973, 1.442695
  %v1081 = vpow.pop %v1080
  %v1082 = vmul.f32 %v974, 1.442695
  %v1083 = vpow.pop %v1082
  %v1084 = vmul.f32 %v975, 1.442695
  %v1085 = vpow.pop %v1084
  %v1086 = vmul.f32 %v976, 1.442695
  %v1087 = vpow.pop %v1086
  %v1088 = vmul.f32 %v977, 1.442695
  %v1089 = vpow.pop %v1088
  %v1090 = vmul.f32 %v978, 1.442695
  %v1091 = vpow.pop %v1090
  %v1092 = vmul.f32 %v979, 1.442695
  %v1093 = vpow.pop %v1092
  %v1094 = vmul.f32 %v980, 1.442695
  %v1095 = vpow.pop %v1094
  %v1096 = vmul.f32 %v981, 1.442695
  %v1097 = vpow.pop %v1096
  %v1098 = vmul.f32 %v982, 1.442695
  %v1099 = vpow.pop %v1098
  %v1100 = vmul.f32 %v983, 1.442695
  %v1101 = vpow.pop %v1100
  %v1102 = vmul.f32 %v984, 1.442695
  %v1103 = vpow.pop %v1102
  %v1104 = vmul.f32 %v985, 1.442695
  %v1105 = vpow.pop %v1104
  %v1106 = vmul.f32 %v986, 1.442695
  %v1107 = vpow.pop %v1106
  %v1108 = vmul.f32 %v987, 1.442695
  %v1109 = vpow.pop %v1108
  %v1110 = vmul.f32 %v988, 1.442695
  %v1111 = vpow.pop %v1110
  %v1112 = vmul.f32 %v989, 1.442695
  %v1113 = vpow.pop %v1112
  %v1114 = vmul.f32 %v990, 1.442695
  %v1115 = vpow.pop %v1114
  %v1116 = vmul.f32 %v991, 1.442695
  %v1117 = vpow.pop %v1116
  %v1118 = vmul.f32 %v992, 1.442695
  %v1119 = vpow.pop %v1118
  %v1120 = vmul.f32 %v993, 1.442695
  %v1121 = vpow.pop %v1120
  %v1122 = vadd.f32 %v995, 1.0
  %v1123 = vadd.f32 %v997, 1.0
  %v1124 = vadd.f32 %v999, 1.0
  %v1125 = vadd.f32 %v1001, 1.0
  %v1126 = vadd.f32 %v1003, 1.0
  %v1127 = vadd.f32 %v1005, 1.0
  %v1128 = vadd.f32 %v1007, 1.0
  %v1129 = vadd.f32 %v1009, 1.0
  %v1130 = vadd.f32 %v1011, 1.0
  %v1131 = vadd.f32 %v1013, 1.0
  %v1132 = vadd.f32 %v1015, 1.0
  %v1133 = vadd.f32 %v1017, 1.0
  %v1134 = vadd.f32 %v1019, 1.0
  %v1135 = vadd.f32 %v1021, 1.0
  %v1136 = vadd.f32 %v1023, 1.0
  %v1137 = vadd.f32 %v1025, 1.0
  %v1138 = vadd.f32 %v1027, 1.0
  %v1139 = vadd.f32 %v1029, 1.0
  %v1140 = vadd.f32 %v1031, 1.0
  %v1141 = vadd.f32 %v1033, 1.0
  %v1142 = vadd.f32 %v1035, 1.0
  %v1143 = vadd.f32 %v1037, 1.0
  %v1144 = vadd.f32 %v1039, 1.0
  %v1145 = vadd.f32 %v1041, 1.0
  %v1146 = vadd.f32 %v1043, 1.0
  %v1147 = vadd.f32 %v1045, 1.0
  %v1148 = vadd.f32 %v1047, 1.0
  %v1149 = vadd.f32 %v1049, 1.0
  %v1150 = vadd.f32 %v1051, 1.0
  %v1151 = vadd.f32 %v1053, 1.0
  %v1152 = vadd.f32 %v1055, 1.0
  %v1153 = vadd.f32 %v1057, 1.0
  %v1154 = vadd.f32 %v1059, 1.0
  %v1155 = vadd.f32 %v1061, 1.0
  %v1156 = vadd.f32 %v1063, 1.0
  %v1157 = vadd.f32 %v1065, 1.0
  %v1158 = vadd.f32 %v1067, 1.0
  %v1159 = vadd.f32 %v1069, 1.0
  %v1160 = vadd.f32 %v1071, 1.0
  %v1161 = vadd.f32 %v1073, 1.0
  %v1162 = vadd.f32 %v1075, 1.0
  %v1163 = vadd.f32 %v1077, 1.0
  %v1164 = vadd.f32 %v1079, 1.0
  %v1165 = vadd.f32 %v1081, 1.0
  %v1166 = vadd.f32 %v1083, 1.0
  %v1167 = vadd.f32 %v1085, 1.0
  %v1168 = vadd.f32 %v1087, 1.0
  %v1169 = vadd.f32 %v1089, 1.0
  %v1170 = vadd.f32 %v1091, 1.0
  %v1171 = vadd.f32 %v1093, 1.0
  %v1172 = vadd.f32 %v1095, 1.0
  %v1173 = vadd.f32 %v1097, 1.0
  %v1174 = vadd.f32 %v1099, 1.0
  %v1175 = vadd.f32 %v1101, 1.0
  %v1176 = vadd.f32 %v1103, 1.0
  %v1177 = vadd.f32 %v1105, 1.0
  %v1178 = vadd.f32 %v1107, 1.0
  %v1179 = vadd.f32 %v1109, 1.0
  %v1180 = vadd.f32 %v1111, 1.0
  %v1181 = vadd.f32 %v1113, 1.0
  %v1182 = vadd.f32 %v1115, 1.0
  %v1183 = vadd.f32 %v1117, 1.0
  %v1184 = vadd.f32 %v1119, 1.0
  %v1185 = vadd.f32 %v1121, 1.0
  %v1186 = vrcp.pop %v1122
  %v1187 = vmul.f32 1.0, %v1186
  %v1188 = vrcp.pop %v1123
  %v1189 = vmul.f32 1.0, %v1188
  %v1190 = vrcp.pop %v1124
  %v1191 = vmul.f32 1.0, %v1190
  %v1192 = vrcp.pop %v1125
  %v1193 = vmul.f32 1.0, %v1192
  %v1194 = vrcp.pop %v1126
  %v1195 = vmul.f32 1.0, %v1194
  %v1196 = vrcp.pop %v1127
  %v1197 = vmul.f32 1.0, %v1196
  %v1198 = vrcp.pop %v1128
  %v1199 = vmul.f32 1.0, %v1198
  %v1200 = vrcp.pop %v1129
  %v1201 = vmul.f32 1.0, %v1200
  %v1202 = vrcp.pop %v1130
  %v1203 = vmul.f32 1.0, %v1202
  %v1204 = vrcp.pop %v1131
  %v1205 = vmul.f32 1.0, %v1204
  %v1206 = vrcp.pop %v1132
  %v1207 = vmul.f32 1.0, %v1206
  %v1208 = vrcp.pop %v1133
  %v1209 = vmul.f32 1.0, %v1208
  %v1210 = vrcp.pop %v1134
  %v1211 = vmul.f32 1.0, %v1210
  %v1212 = vrcp.pop %v1135
  %v1213 = vmul.f32 1.0, %v1212
  %v1214 = vrcp.pop %v1136
  %v1215 = vmul.f32 1.0, %v1214
  %v1216 = vrcp.pop %v1137
  %v1217 = vmul.f32 1.0, %v1216
  %v1218 = vrcp.pop %v1138
  %v1219 = vmul.f32 1.0, %v1218
  %v1220 = vrcp.pop %v1139
  %v1221 = vmul.f32 1.0, %v1220
  %v1222 = vrcp.pop %v1140
  %v1223 = vmul.f32 1.0, %v1222
  %v1224 = vrcp.pop %v1141
  %v1225 = vmul.f32 1.0, %v1224
  %v1226 = vrcp.pop %v1142
  %v1227 = vmul.f32 1.0, %v1226
  %v1228 = vrcp.pop %v1143
  %v1229 = vmul.f32 1.0, %v1228
  %v1230 = vrcp.pop %v1144
  %v1231 = vmul.f32 1.0, %v1230
  %v1232 = vrcp.pop %v1145
  %v1233 = vmul.f32 1.0, %v1232
  %v1234 = vrcp.pop %v1146
  %v1235 = vmul.f32 1.0, %v1234
  %v1236 = vrcp.pop %v1147
  %v1237 = vmul.f32 1.0, %v1236
  %v1238 = vrcp.pop %v1148
  %v1239 = vmul.f32 1.0, %v1238
  %v1240 = vrcp.pop %v1149
  %v1241 = vmul.f32 1.0, %v1240
  %v1242 = vrcp.pop %v1150
  %v1243 = vmul.f32 1.0, %v1242
  %v1244 = vrcp.pop %v1151
  %v1245 = vmul.f32 1.0, %v1244
  %v1246 = vrcp.pop %v1152
  %v1247 = vmul.f32 1.0, %v1246
  %v1248 = vrcp.pop %v1153
  %v1249 = vmul.f32 1.0, %v1248
  %v1250 = vrcp.pop %v1154
  %v1251 = vmul.f32 1.0, %v1250
  %v1252 = vrcp.pop %v1155
  %v1253 = vmul.f32 1.0, %v1252
  %v1254 = vrcp.pop %v1156
  %v1255 = vmul.f32 1.0, %v1254
  %v1256 = vrcp.pop %v1157
  %v1257 = vmul.f32 1.0, %v1256
  %v1258 = vrcp.pop %v1158
  %v1259 = vmul.f32 1.0, %v1258
  %v1260 = vrcp.pop %v1159
  %v1261 = vmul.f32 1.0, %v1260
  %v1262 = vrcp.pop %v1160
  %v1263 = vmul.f32 1.0, %v1262
  %v1264 = vrcp.pop %v1161
  %v1265 = vmul.f32 1.0, %v1264
  %v1266 = vrcp.pop %v1162
  %v1267 = vmul.f32 1.0, %v1266
  %v1268 = vrcp.pop %v1163
  %v1269 = vmul.f32 1.0, %v1268
  %v1270 = vrcp.pop %v1164
  %v1271 = vmul.f32 1.0, %v1270
  %v1272 = vrcp.pop %v1165
  %v1273 = vmul.f32 1.0, %v1272
  %v1274 = vrcp.pop %v1166
  %v1275 = vmul.f32 1.0, %v1274
  %v1276 = vrcp.pop %v1167
  %v1277 = vmul.f32 1.0, %v1276
  %v1278 = vrcp.pop %v1168
  %v1279 = vmul.f32 1.0, %v1278
  %v1280 = vrcp.pop %v1169
  %v1281 = vmul.f32 1.0, %v1280
  %v1282 = vrcp.pop %v1170
  %v1283 = vmul.f32 1.0, %v1282
  %v1284 = vrcp.pop %v1171
  %v1285 = vmul.f32 1.0, %v1284
  %v1286 = vrcp.pop %v1172
  %v1287 = vmul.f32 1.0, %v1286
  %v1288 = vrcp.pop %v1173
  %v1289 = vmul.f32 1.0, %v1288
  %v1290 = vrcp.pop %v1174
  %v1291 = vmul.f32 1.0, %v1290
  %v1292 = vrcp.pop %v1175
  %v1293 = vmul.f32 1.0, %v1292
  %v1294 = vrcp.pop %v1176
  %v1295 = vmul.f32 1.0, %v1294
  %v1296 = vrcp.pop %v1177
  %v1297 = vmul.f32 1.0, %v1296
  %v1298 = vrcp.pop %v1178
  %v1299 = vmul.f32 1.0, %v1298
  %v1300 = vrcp.pop %v1179
  %v1301 = vmul.f32 1.0, %v1300
  %v1302 = vrcp.pop %v1180
  %v1303 = vmul.f32 1.0, %v1302
  %v1304 = vrcp.pop %v1181
  %v1305 = vmul.f32 1.0, %v1304
  %v1306 = vrcp.pop %v1182
  %v1307 = vmul.f32 1.0, %v1306
  %v1308 = vrcp.pop %v1183
  %v1309 = vmul.f32 1.0, %v1308
  %v1310 = vrcp.pop %v1184
  %v1311 = vmul.f32 1.0, %v1310
  %v1312 = vrcp.pop %v1185
  %v1313 = vmul.f32 1.0, %v1312
  %v1314 = vmul.f32 %v866, %v1187
  %v1315 = vmul.f32 %v867, %v1189
  %v1316 = vmul.f32 %v868, %v1191
  %v1317 = vmul.f32 %v869, %v1193
  %v1318 = vmul.f32 %v870, %v1195
  %v1319 = vmul.f32 %v871, %v1197
  %v1320 = vmul.f32 %v872, %v1199
  %v1321 = vmul.f32 %v873, %v1201
  %v1322 = vmul.f32 %v874, %v1203
  %v1323 = vmul.f32 %v875, %v1205
  %v1324 = vmul.f32 %v876, %v1207
  %v1325 = vmul.f32 %v877, %v1209
  %v1326 = vmul.f32 %v878, %v1211
  %v1327 = vmul.f32 %v879, %v1213
  %v1328 = vmul.f32 %v880, %v1215
  %v1329 = vmul.f32 %v881, %v1217
  %v1330 = vmul.f32 %v882, %v1219
  %v1331 = vmul.f32 %v883, %v1221
  %v1332 = vmul.f32 %v884, %v1223
  %v1333 = vmul.f32 %v885, %v1225
  %v1334 = vmul.f32 %v886, %v1227
  %v1335 = vmul.f32 %v887, %v1229
  %v1336 = vmul.f32 %v888, %v1231
  %v1337 = vmul.f32 %v889, %v1233
  %v1338 = vmul.f32 %v890, %v1235
  %v1339 = vmul.f32 %v891, %v1237
  %v1340 = vmul.f32 %v892, %v1239
  %v1341 = vmul.f32 %v893, %v1241
  %v1342 = vmul.f32 %v894, %v1243
  %v1343 = vmul.f32 %v895, %v1245
  %v1344 = vmul.f32 %v896, %v1247
  %v1345 = vmul.f32 %v897, %v1249
  %v1346 = vmul.f32 %v898, %v1251
  %v1347 = vmul.f32 %v899, %v1253
  %v1348 = vmul.f32 %v900, %v1255
  %v1349 = vmul.f32 %v901, %v1257
  %v1350 = vmul.f32 %v902, %v1259
  %v1351 = vmul.f32 %v903, %v1261
  %v1352 = vmul.f32 %v904, %v1263
  %v1353 = vmul.f32 %v905, %v1265
  %v1354 = vmul.f32 %v906, %v1267
  %v1355 = vmul.f32 %v907, %v1269
  %v1356 = vmul.f32 %v908, %v1271
  %v1357 = vmul.f32 %v909, %v1273
  %v1358 = vmul.f32 %v910, %v1275
  %v1359 = vmul.f32 %v911, %v1277
  %v1360 = vmul.f32 %v912, %v1279
  %v1361 = vmul.f32 %v913, %v1281
  %v1362 = vmul.f32 %v914, %v1283
  %v1363 = vmul.f32 %v915, %v1285
  %v1364 = vmul.f32 %v916, %v1287
  %v1365 = vmul.f32 %v917, %v1289
  %v1366 = vmul.f32 %v918, %v1291
  %v1367 = vmul.f32 %v919, %v1293
  %v1368 = vmul.f32 %v920, %v1295
  %v1369 = vmul.f32 %v921, %v1297
  %v1370 = vmul.f32 %v922, %v1299
  %v1371 = vmul.f32 %v923, %v1301
  %v1372 = vmul.f32 %v924, %v1303
  %v1373 = vmul.f32 %v925, %v1305
  %v1374 = vmul.f32 %v926, %v1307
  %v1375 = vmul.f32 %v927, %v1309
  %v1376 = vmul.f32 %v928, %v1311
  %v1377 = vmul.f32 %v929, %v1313
  %v1378 = vadd.f32 %v1314, %v1315
  %v1379 = vadd.f32 %v1378, %v1316
  %v1380 = vadd.f32 %v1379, %v1317
  %v1381 = vadd.f32 %v1380, %v1318
  %v1382 = vadd.f32 %v1381, %v1319
  %v1383 = vadd.f32 %v1382, %v1320
  %v1384 = vadd.f32 %v1383, %v1321
  %v1385 = vadd.f32 %v1384, %v1322
  %v1386 = vadd.f32 %v1385, %v1323
  %v1387 = vadd.f32 %v1386, %v1324
  %v1388 = vadd.f32 %v1387, %v1325
  %v1389 = vadd.f32 %v1388, %v1326
  %v1390 = vadd.f32 %v1389, %v1327
  %v1391 = vadd.f32 %v1390, %v1328
  %v1392 = vadd.f32 %v1391, %v1329
  %v1393 = vadd.f32 %v1392, %v1330
  %v1394 = vadd.f32 %v1393, %v1331
  %v1395 = vadd.f32 %v1394, %v1332
  %v1396 = vadd.f32 %v1395, %v1333
  %v1397 = vadd.f32 %v1396, %v1334
  %v1398 = vadd.f32 %v1397, %v1335
  %v1399 = vadd.f32 %v1398, %v1336
  %v1400 = vadd.f32 %v1399, %v1337
  %v1401 = vadd.f32 %v1400, %v1338
  %v1402 = vadd.f32 %v1401, %v1339
  %v1403 = vadd.f32 %v1402, %v1340
  %v1404 = vadd.f32 %v1403, %v1341
  %v1405 = vadd.f32 %v1404, %v1342
  %v1406 = vadd.f32 %v1405, %v1343
  %v1407 = vadd.f32 %v1406, %v1344
  %v1408 = vadd.f32 %v1407, %v1345
  %v1409 = vadd.f32 %v1408, %v1346
  %v1410 = vadd.f32 %v1409, %v1347
  %v1411 = vadd.f32 %v1410, %v1348
  %v1412 = vadd.f32 %v1411, %v1349
  %v1413 = vadd.f32 %v1412, %v1350
  %v1414 = vadd.f32 %v1413, %v1351
  %v1415 = vadd.f32 %v1414, %v1352
  %v1416 = vadd.f32 %v1415, %v1353
  %v1417 = vadd.f32 %v1416, %v1354
  %v1418 = vadd.f32 %v1417, %v1355
  %v1419 = vadd.f32 %v1418, %v1356
  %v1420 = vadd.f32 %v1419, %v1357
  %v1421 = vadd.f32 %v1420, %v1358
  %v1422 = vadd.f32 %v1421, %v1359
  %v1423 = vadd.f32 %v1422, %v1360
  %v1424 = vadd.f32 %v1423, %v1361
  %v1425 = vadd.f32 %v1424, %v1362
  %v1426 = vadd.f32 %v1425, %v1363
  %v1427 = vadd.f32 %v1426, %v1364
  %v1428 = vadd.f32 %v1427, %v1365
  %v1429 = vadd.f32 %v1428, %v1366
  %v1430 = vadd.f32 %v1429, %v1367
  %v1431 = vadd.f32 %v1430, %v1368
  %v1432 = vadd.f32 %v1431, %v1369
  %v1433 = vadd.f32 %v1432, %v1370
  %v1434 = vadd.f32 %v1433, %v1371
  %v1435 = vadd.f32 %v1434, %v1372
  %v1436 = vadd.f32 %v1435, %v1373
  %v1437 = vadd.f32 %v1436, %v1374
  %v1438 = vadd.f32 %v1437, %v1375
  %v1439 = vadd.f32 %v1438, %v1376
  %v1440 = vadd.f32 %v1439, %v1377
  %v1441 = vrot.slane %v1440, 4
  %v1442 = vadd.f32 %v1440, %v1441
  %v1443 = vrot.slane %v1442, 2
  %v1444 = vadd.f32 %v1442, %v1443
  %v1445 = vrot.slane %v1444, 1
  %v1446 = vadd.f32 %v1444, %v1445
  %v1447 = vmul.f32 %v1314, %v1314
  %v1448 = vmul.f32 %v1315, %v1315
  %v1449 = vmul.f32 %v1316, %v1316
  %v1450 = vmul.f32 %v1317, %v1317
  %v1451 = vmul.f32 %v1318, %v1318
  %v1452 = vmul.f32 %v1319, %v1319
  %v1453 = vmul.f32 %v1320, %v1320
  %v1454 = vmul.f32 %v1321, %v1321
  %v1455 = vmul.f32 %v1322, %v1322
  %v1456 = vmul.f32 %v1323, %v1323
  %v1457 = vmul.f32 %v1324, %v1324
  %v1458 = vmul.f32 %v1325, %v1325
  %v1459 = vmul.f32 %v1326, %v1326
  %v1460 = vmul.f32 %v1327, %v1327
  %v1461 = vmul.f32 %v1328, %v1328
  %v1462 = vmul.f32 %v1329, %v1329
  %v1463 = vmul.f32 %v1330, %v1330
  %v1464 = vmul.f32 %v1331, %v1331
  %v1465 = vmul.f32 %v1332, %v1332
  %v1466 = vmul.f32 %v1333, %v1333
  %v1467 = vmul.f32 %v1334, %v1334
  %v1468 = vmul.f32 %v1335, %v1335
  %v1469 = vmul.f32 %v1336, %v1336
  %v1470 = vmul.f32 %v1337, %v1337
  %v1471 = vmul.f32 %v1338, %v1338
  %v1472 = vmul.f32 %v1339, %v1339
  %v1473 = vmul.f32 %v1340, %v1340
  %v1474 = vmul.f32 %v1341, %v1341
  %v1475 = vmul.f32 %v1342, %v1342
  %v1476 = vmul.f32 %v1343, %v1343
  %v1477 = vmul.f32 %v1344, %v1344
  %v1478 = vmul.f32 %v1345, %v1345
  %v1479 = vmul.f32 %v1346, %v1346
  %v1480 = vmul.f32 %v1347, %v1347
  %v1481 = vmul.f32 %v1348, %v1348
  %v1482 = vmul.f32 %v1349, %v1349
  %v1483 = vmul.f32 %v1350, %v1350
  %v1484 = vmul.f32 %v1351, %v1351
  %v1485 = vmul.f32 %v1352, %v1352
  %v1486 = vmul.f32 %v1353, %v1353
  %v1487 = vmul.f32 %v1354, %v1354
  %v1488 = vmul.f32 %v1355, %v1355
  %v1489 = vmul.f32 %v1356, %v1356
  %v1490 = vmul.f32 %v1357, %v1357
  %v1491 = vmul.f32 %v1358, %v1358
  %v1492 = vmul.f32 %v1359, %v1359
  %v1493 = vmul.f32 %v1360, %v1360
  %v1494 = vmul.f32 %v1361, %v1361
  %v1495 = vmul.f32 %v1362, %v1362
  %v1496 = vmul.f32 %v1363, %v1363
  %v1497 = vmul.f32 %v1364, %v1364
  %v1498 = vmul.f32 %v1365, %v1365
  %v1499 = vmul.f32 %v1366, %v1366
  %v1500 = vmul.f32 %v1367, %v1367
  %v1501 = vmul.f32 %v1368, %v1368
  %v1502 = vmul.f32 %v1369, %v1369
  %v1503 = vmul.f32 %v1370, %v1370
  %v1504 = vmul.f32 %v1371, %v1371
  %v1505 = vmul.f32 %v1372, %v1372
  %v1506 = vmul.f32 %v1373, %v1373
  %v1507 = vmul.f32 %v1374, %v1374
  %v1508 = vmul.f32 %v1375, %v1375
  %v1509 = vmul.f32 %v1376, %v1376
  %v1510 = vmul.f32 %v1377, %v1377
  %v1511 = vadd.f32 %v1447, %v1448
  %v1512 = vadd.f32 %v1511, %v1449
  %v1513 = vadd.f32 %v1512, %v1450
  %v1514 = vadd.f32 %v1513, %v1451
  %v1515 = vadd.f32 %v1514, %v1452
  %v1516 = vadd.f32 %v1515, %v1453
  %v1517 = vadd.f32 %v1516, %v1454
  %v1518 = vadd.f32 %v1517, %v1455
  %v1519 = vadd.f32 %v1518, %v1456
  %v1520 = vadd.f32 %v1519, %v1457
  %v1521 = vadd.f32 %v1520, %v1458
  %v1522 = vadd.f32 %v1521, %v1459
  %v1523 = vadd.f32 %v1522, %v1460
  %v1524 = vadd.f32 %v1523, %v1461
  %v1525 = vadd.f32 %v1524, %v1462
  %v1526 = vadd.f32 %v1525, %v1463
  %v1527 = vadd.f32 %v1526, %v1464
  %v1528 = vadd.f32 %v1527, %v1465
  %v1529 = vadd.f32 %v1528, %v1466
  %v1530 = vadd.f32 %v1529, %v1467
  %v1531 = vadd.f32 %v1530, %v1468
  %v1532 = vadd.f32 %v1531, %v1469
  %v1533 = vadd.f32 %v1532, %v1470
  %v1534 = vadd.f32 %v1533, %v1471
  %v1535 = vadd.f32 %v1534, %v1472
  %v1536 = vadd.f32 %v1535, %v1473
  %v1537 = vadd.f32 %v1536, %v1474
  %v1538 = vadd.f32 %v1537, %v1475
  %v1539 = vadd.f32 %v1538, %v1476
  %v1540 = vadd.f32 %v1539, %v1477
  %v1541 = vadd.f32 %v1540, %v1478
  %v1542 = vadd.f32 %v1541, %v1479
  %v1543 = vadd.f32 %v1542, %v1480
  %v1544 = vadd.f32 %v1543, %v1481
  %v1545 = vadd.f32 %v1544, %v1482
  %v1546 = vadd.f32 %v1545, %v1483
  %v1547 = vadd.f32 %v1546, %v1484
  %v1548 = vadd.f32 %v1547, %v1485
  %v1549 = vadd.f32 %v1548, %v1486
  %v1550 = vadd.f32 %v1549, %v1487
  %v1551 = vadd.f32 %v1550, %v1488
  %v1552 = vadd.f32 %v1551, %v1489
  %v1553 = vadd.f32 %v1552, %v1490
  %v1554 = vadd.f32 %v1553, %v1491
  %v1555 = vadd.f32 %v1554, %v1492
  %v1556 = vadd.f32 %v1555, %v1493
  %v1557 = vadd.f32 %v1556, %v1494
  %v1558 = vadd.f32 %v1557, %v1495
  %v1559 = vadd.f32 %v1558, %v1496
  %v1560 = vadd.f32 %v1559, %v1497
  %v1561 = vadd.f32 %v1560, %v1498
  %v1562 = vadd.f32 %v1561, %v1499
  %v1563 = vadd.f32 %v1562, %v1500
  %v1564 = vadd.f32 %v1563, %v1501
  %v1565 = vadd.f32 %v1564, %v1502
  %v1566 = vadd.f32 %v1565, %v1503
  %v1567 = vadd.f32 %v1566, %v1504
  %v1568 = vadd.f32 %v1567, %v1505
  %v1569 = vadd.f32 %v1568, %v1506
  %v1570 = vadd.f32 %v1569, %v1507
  %v1571 = vadd.f32 %v1570, %v1508
  %v1572 = vadd.f32 %v1571, %v1509
  %v1573 = vadd.f32 %v1572, %v1510
  %v1574 = vrot.slane %v1573, 4
  %v1575 = vadd.f32 %v1573, %v1574
  %v1576 = vrot.slane %v1575, 2
  %v1577 = vadd.f32 %v1575, %v1576
  %v1578 = vrot.slane %v1577, 1
  %v1579 = vadd.f32 %v1577, %v1578
  %v1580 = vlaneseq
  %v1581 = vshrl.u32 %v1580, 7
  %vm1582 = vcmp.eq.s32.totalorder %v1581, 0
  %v1583 = vsel %vm1582, %v1446, 0.0
  %vm1584 = vcmp.eq.s32.totalorder %v1581, 1
  %v1585 = vsel %vm1584, %v1579, 0.0
  %v1586 = vadd.f32 %v1583, %v1585
  %1587 = vst [vmem:[%s3] sm:$0xff] %v1586
  // Predicated region
  $region14: #{sn_gated_conv2d_v0.2} parent=0 // pred_check
    _
  $region15: #{sn_gated_conv2d_v0.2} parent=0 // pred_check_branch
    %1589 = sbr.rel (0) target = $region17
  $region16: #{sn_gated_conv2d_v0.2} parent=0 // pred_region
    _
  $region17: #{sn_gated_conv2d_v0.2} parent=0 // pred_fallthru
    _
  // Predicated region
  $region18: #{sn_gated_conv2d_v0.2} parent=0 // pred_check
    _
  $region19: #{sn_gated_conv2d_v0.2} parent=0 // pred_check_branch
    %1591 = sbr.rel (0) target = $region21
  $region20: #{sn_gated_conv2d_v0.2} parent=0 // pred_region
    _
  $region21: #{sn_gated_conv2d_v0.2} parent=0 // pred_fallthru
    _

// kernel: sn_gated_conv2d_v0.3
$region0: #{sn_gated_conv2d_v0.3}
  #allocation0 [shape = 'u32[]', space=smem, size = 0x4, offset = 0x4, fixed_abs, tag = 'smem constant byte address 0x4 - core index']
  #allocation1 [shape = 'u32[144,128]{1,0:T(1,128)}', space=vmem, size = 0x12000, scoped, tag = 'internal scratch']
  %s0 = inlined_call_operand.vmem [shape: bf16[512,36], index: 0, kind: input, shape index: {}]
  %s1 = inlined_call_operand.vmem [shape: bf16[36,256], index: 1, kind: input, shape index: {}]
  %s2 = inlined_call_operand.vmem [shape: f32[1,256], index: 2, kind: input, shape index: {}]
  %s3 = inlined_call_operand.vmem [shape: f32[1,128], index: 3, kind: input, shape index: {}]
  %s4 = inlined_call_operand.vmem [shape: f32[1,128], index: 4, kind: input, shape index: {}]
  %s5 = inlined_call_operand.vmem [shape: f32[512,128], index: 5, kind: output, shape index: {}]
  %s6 = sld [smem:[#allocation0]]
  $region30: #{sn_gated_conv2d_v0.3} parent=0
    _
  %s8 = ssub.s32 1, %s6
  %s9 = scalar_select 0, %s8, %s6
  // Predicated region
  $region2: #{sn_gated_conv2d_v0.3} parent=0 // pred_check
    _
  $region3: #{sn_gated_conv2d_v0.3} parent=0 // pred_check_branch
    %11 = sbr.rel (0) target = $region5
  $region4: #{sn_gated_conv2d_v0.3} parent=0 // pred_region
    _
  $region5: #{sn_gated_conv2d_v0.3} parent=0 // pred_fallthru
    _
  // Predicated region
  $region6: #{sn_gated_conv2d_v0.3} parent=0 // pred_check
    _
  $region7: #{sn_gated_conv2d_v0.3} parent=0 // pred_check_branch
    %13 = sbr.rel (0) target = $region9
  $region8: #{sn_gated_conv2d_v0.3} parent=0 // pred_region
    _
  $region9: #{sn_gated_conv2d_v0.3} parent=0 // pred_fallthru
    _
  // Predicated region
  $region10: #{sn_gated_conv2d_v0.3} parent=0 // pred_check
    _
  $region11: #{sn_gated_conv2d_v0.3} parent=0 // pred_check_branch
    %15 = sbr.rel (0) target = $region13
  $region12: #{sn_gated_conv2d_v0.3} parent=0 // pred_region
    _
  $region13: #{sn_gated_conv2d_v0.3} parent=0 // pred_fallthru
    _
  // Predicated region
  $region14: #{sn_gated_conv2d_v0.3} parent=0 // pred_check
    _
  $region15: #{sn_gated_conv2d_v0.3} parent=0 // pred_check_branch
    %17 = sbr.rel (0) target = $region17
  $region16: #{sn_gated_conv2d_v0.3} parent=0 // pred_region
    _
  $region17: #{sn_gated_conv2d_v0.3} parent=0 // pred_fallthru
    _
  // Predicated region
  $region18: #{sn_gated_conv2d_v0.3} parent=0 // pred_check
    _
  $region19: #{sn_gated_conv2d_v0.3} parent=0 // pred_check_branch
    %19 = sbr.rel (0) target = $region21
  $region20: #{sn_gated_conv2d_v0.3} parent=0 // pred_region
    _
  $region21: #{sn_gated_conv2d_v0.3} parent=0 // pred_fallthru
    _
  %v21 = vld [vmem:[%s0] sm:$0xf]
  %v22 = vld [vmem:[%s0 + $0x4] sm:$0xf]
  %v23 = vld [vmem:[%s0 + $0x8] sm:$0xf]
  %v24 = vld [vmem:[%s0 + $0xc] sm:$0xf]
  %v25 = vld [vmem:[%s0 + $0x10] sm:$0xf]
  %v26 = vld [vmem:[%s0 + $0x14] sm:$0xf]
  %v27 = vld [vmem:[%s0 + $0x18] sm:$0xf]
  %v28 = vld [vmem:[%s0 + $0x1c] sm:$0xf]
  %v29 = vld [vmem:[%s0 + $0x20] sm:$0xf]
  %v30 = vld [vmem:[%s0 + $0x24] sm:$0xf]
  %v31 = vld [vmem:[%s0 + $0x28] sm:$0xf]
  %v32 = vld [vmem:[%s0 + $0x2c] sm:$0xf]
  %v33 = vld [vmem:[%s0 + $0x30] sm:$0xf]
  %v34 = vld [vmem:[%s0 + $0x34] sm:$0xf]
  %v35 = vld [vmem:[%s0 + $0x38] sm:$0xf]
  %v36 = vld [vmem:[%s0 + $0x3c] sm:$0xf]
  %v37 = vld [vmem:[%s0 + $0x40] sm:$0xf]
  %v38 = vld [vmem:[%s0 + $0x44] sm:$0xf]
  %v39 = vld [vmem:[%s0 + $0x48] sm:$0xf]
  %v40 = vld [vmem:[%s0 + $0x4c] sm:$0xf]
  %v41 = vld [vmem:[%s0 + $0x50] sm:$0xf]
  %v42 = vld [vmem:[%s0 + $0x54] sm:$0xf]
  %v43 = vld [vmem:[%s0 + $0x58] sm:$0xf]
  %v44 = vld [vmem:[%s0 + $0x5c] sm:$0xf]
  %v45 = vld [vmem:[%s0 + $0x60] sm:$0xf]
  %v46 = vld [vmem:[%s0 + $0x64] sm:$0xf]
  %v47 = vld [vmem:[%s0 + $0x68] sm:$0xf]
  %v48 = vld [vmem:[%s0 + $0x6c] sm:$0xf]
  %v49 = vld [vmem:[%s0 + $0x70] sm:$0xf]
  %v50 = vld [vmem:[%s0 + $0x74] sm:$0xf]
  %v51 = vld [vmem:[%s0 + $0x78] sm:$0xf]
  %v52 = vld [vmem:[%s0 + $0x7c] sm:$0xf]
  %v53 = vld [vmem:[%s0 + $0x80] sm:$0xf]
  %v54 = vld [vmem:[%s0 + $0x84] sm:$0xf]
  %v55 = vld [vmem:[%s0 + $0x88] sm:$0xf]
  %v56 = vld [vmem:[%s0 + $0x8c] sm:$0xf]
  %v57 = vld [vmem:[%s0 + $0x90] sm:$0xf]
  %v58 = vld [vmem:[%s0 + $0x94] sm:$0xf]
  %v59 = vld [vmem:[%s0 + $0x98] sm:$0xf]
  %v60 = vld [vmem:[%s0 + $0x9c] sm:$0xf]
  %v61 = vld [vmem:[%s0 + $0xa0] sm:$0xf]
  %v62 = vld [vmem:[%s0 + $0xa4] sm:$0xf]
  %v63 = vld [vmem:[%s0 + $0xa8] sm:$0xf]
  %v64 = vld [vmem:[%s0 + $0xac] sm:$0xf]
  %v65 = vld [vmem:[%s0 + $0xb0] sm:$0xf]
  %v66 = vld [vmem:[%s0 + $0xb4] sm:$0xf]
  %v67 = vld [vmem:[%s0 + $0xb8] sm:$0xf]
  %v68 = vld [vmem:[%s0 + $0xbc] sm:$0xf]
  %v69 = vld [vmem:[%s0 + $0xc0] sm:$0xf]
  %v70 = vld [vmem:[%s0 + $0xc4] sm:$0xf]
  %v71 = vld [vmem:[%s0 + $0xc8] sm:$0xf]
  %v72 = vld [vmem:[%s0 + $0xcc] sm:$0xf]
  %v73 = vld [vmem:[%s0 + $0xd0] sm:$0xf]
  %v74 = vld [vmem:[%s0 + $0xd4] sm:$0xf]
  %v75 = vld [vmem:[%s0 + $0xd8] sm:$0xf]
  %v76 = vld [vmem:[%s0 + $0xdc] sm:$0xf]
  %v77 = vld [vmem:[%s0 + $0xe0] sm:$0xf]
  %v78 = vld [vmem:[%s0 + $0xe4] sm:$0xf]
  %v79 = vld [vmem:[%s0 + $0xe8] sm:$0xf]
  %v80 = vld [vmem:[%s0 + $0xec] sm:$0xf]
  %v81 = vld [vmem:[%s0 + $0xf0] sm:$0xf]
  %v82 = vld [vmem:[%s0 + $0xf4] sm:$0xf]
  %v83 = vld [vmem:[%s0 + $0xf8] sm:$0xf]
  %v84 = vld [vmem:[%s0 + $0xfc] sm:$0xf]
  %v85 = vld [vmem:[%s1] sm:$0xff]
  %v86 = vld [vmem:[%s1 + $0x8] sm:$0xff]
  %v87 = vld [vmem:[%s1 + $0x10] sm:$0xff]
  %v88 = vld [vmem:[%s1 + $0x18] sm:$0xff]
  %v89 = vld [vmem:[%s1 + $0x20] sm:$0x33]
  %v90 = vld [vmem:[%s2] sm:$0x3]
  %v92 = vlaneseq
  %v93 = vshrl.u32 %v92, 7
  %v94 = vsub.s32 0, %v93
  %v95 = vrot.slane %v90, %v94
  %v96 = vlaneseq
  %v97 = vshrl.u32 %v96, 7
  %v98 = vsub.s32 1, %v97
  %v99 = vrot.slane %v90, %v98
  %v166 = vunpack.c.l.b16 %v21
  %v167 = vunpack.c.l.b16 %v22
  %v168 = vunpack.c.l.b16 %v23
  %v169 = vunpack.c.l.b16 %v24
  %v170 = vunpack.c.l.b16 %v25
  %v171 = vunpack.c.l.b16 %v26
  %v172 = vunpack.c.l.b16 %v27
  %v173 = vunpack.c.l.b16 %v28
  %v174 = vunpack.c.l.b16 %v29
  %v175 = vunpack.c.l.b16 %v30
  %v176 = vunpack.c.l.b16 %v31
  %v177 = vunpack.c.l.b16 %v32
  %v178 = vunpack.c.l.b16 %v33
  %v179 = vunpack.c.l.b16 %v34
  %v180 = vunpack.c.l.b16 %v35
  %v181 = vunpack.c.l.b16 %v36
  %v182 = vunpack.c.l.b16 %v37
  %v183 = vunpack.c.l.b16 %v38
  %v184 = vunpack.c.l.b16 %v39
  %v185 = vunpack.c.l.b16 %v40
  %v186 = vunpack.c.l.b16 %v41
  %v187 = vunpack.c.l.b16 %v42
  %v188 = vunpack.c.l.b16 %v43
  %v189 = vunpack.c.l.b16 %v44
  %v190 = vunpack.c.l.b16 %v45
  %v191 = vunpack.c.l.b16 %v46
  %v192 = vunpack.c.l.b16 %v47
  %v193 = vunpack.c.l.b16 %v48
  %v194 = vunpack.c.l.b16 %v49
  %v195 = vunpack.c.l.b16 %v50
  %v196 = vunpack.c.l.b16 %v51
  %v197 = vunpack.c.l.b16 %v52
  %v198 = vunpack.c.l.b16 %v53
  %v199 = vunpack.c.l.b16 %v54
  %v200 = vunpack.c.l.b16 %v55
  %v201 = vunpack.c.l.b16 %v56
  %v202 = vunpack.c.l.b16 %v57
  %v203 = vunpack.c.l.b16 %v58
  %v204 = vunpack.c.l.b16 %v59
  %v205 = vunpack.c.l.b16 %v60
  %v206 = vunpack.c.l.b16 %v61
  %v207 = vunpack.c.l.b16 %v62
  %v208 = vunpack.c.l.b16 %v63
  %v209 = vunpack.c.l.b16 %v64
  %v210 = vunpack.c.l.b16 %v65
  %v211 = vunpack.c.l.b16 %v66
  %v212 = vunpack.c.l.b16 %v67
  %v213 = vunpack.c.l.b16 %v68
  %v214 = vunpack.c.l.b16 %v69
  %v215 = vunpack.c.l.b16 %v70
  %v216 = vunpack.c.l.b16 %v71
  %v217 = vunpack.c.l.b16 %v72
  %v218 = vunpack.c.l.b16 %v73
  %v219 = vunpack.c.l.b16 %v74
  %v220 = vunpack.c.l.b16 %v75
  %v221 = vunpack.c.l.b16 %v76
  %v222 = vunpack.c.l.b16 %v77
  %v223 = vunpack.c.l.b16 %v78
  %v224 = vunpack.c.l.b16 %v79
  %v225 = vunpack.c.l.b16 %v80
  %v226 = vunpack.c.l.b16 %v81
  %v227 = vunpack.c.l.b16 %v82
  %v228 = vunpack.c.l.b16 %v83
  %v229 = vunpack.c.l.b16 %v84
  %v230 = vpack.c.b16 %v167, %v166
  %v231 = vpack.c.b16 %v169, %v168
  %v232 = vpack.c.b16 %v171, %v170
  %v233 = vpack.c.b16 %v173, %v172
  %v234 = vpack.c.b16 %v175, %v174
  %v235 = vpack.c.b16 %v177, %v176
  %v236 = vpack.c.b16 %v179, %v178
  %v237 = vpack.c.b16 %v181, %v180
  %v238 = vpack.c.b16 %v183, %v182
  %v239 = vpack.c.b16 %v185, %v184
  %v240 = vpack.c.b16 %v187, %v186
  %v241 = vpack.c.b16 %v189, %v188
  %v242 = vpack.c.b16 %v191, %v190
  %v243 = vpack.c.b16 %v193, %v192
  %v244 = vpack.c.b16 %v195, %v194
  %v245 = vpack.c.b16 %v197, %v196
  %v246 = vpack.c.b16 %v199, %v198
  %v247 = vpack.c.b16 %v201, %v200
  %v248 = vpack.c.b16 %v203, %v202
  %v249 = vpack.c.b16 %v205, %v204
  %v250 = vpack.c.b16 %v207, %v206
  %v251 = vpack.c.b16 %v209, %v208
  %v252 = vpack.c.b16 %v211, %v210
  %v253 = vpack.c.b16 %v213, %v212
  %v254 = vpack.c.b16 %v215, %v214
  %v255 = vpack.c.b16 %v217, %v216
  %v256 = vpack.c.b16 %v219, %v218
  %v257 = vpack.c.b16 %v221, %v220
  %v258 = vpack.c.b16 %v223, %v222
  %v259 = vpack.c.b16 %v225, %v224
  %v260 = vpack.c.b16 %v227, %v226
  %v261 = vpack.c.b16 %v229, %v228
  %v267 = vunpack.c.l.b16 %v85
  %v268 = vunpack.c.h.b16 %v85
  %v269 = vunpack.c.l.b16 %v86
  %v270 = vunpack.c.h.b16 %v86
  %v271 = vunpack.c.l.b16 %v87
  %v272 = vunpack.c.h.b16 %v87
  %v273 = vunpack.c.l.b16 %v88
  %v274 = vunpack.c.h.b16 %v88
  %v275 = vunpack.c.l.b16 %v89
  %v276 = vunpack.c.h.b16 %v89
  %v277 = vpack.c.b16 %v269, %v267
  %v278 = vpack.c.b16 %v270, %v268
  %v279 = vpack.c.b16 %v273, %v271
  %v280 = vpack.c.b16 %v274, %v272
  %v281 = vpack.c.b16 %v275, %v275
  %v282 = vpack.c.b16 %v276, %v276
  %vm287 = vcmask 293888
  %v289 = vsel %vm287, %v230, 0
  %v292 = vsel %vm287, %v231, 0
  %v295 = vsel %vm287, %v232, 0
  %v298 = vsel %vm287, %v233, 0
  %v301 = vsel %vm287, %v234, 0
  %v304 = vsel %vm287, %v235, 0
  %v307 = vsel %vm287, %v236, 0
  %v310 = vsel %vm287, %v237, 0
  %v313 = vsel %vm287, %v238, 0
  %v316 = vsel %vm287, %v239, 0
  %v319 = vsel %vm287, %v240, 0
  %v322 = vsel %vm287, %v241, 0
  %v325 = vsel %vm287, %v242, 0
  %v328 = vsel %vm287, %v243, 0
  %v331 = vsel %vm287, %v244, 0
  %v334 = vsel %vm287, %v245, 0
  %v337 = vsel %vm287, %v246, 0
  %v340 = vsel %vm287, %v247, 0
  %v343 = vsel %vm287, %v248, 0
  %v346 = vsel %vm287, %v249, 0
  %v349 = vsel %vm287, %v250, 0
  %v352 = vsel %vm287, %v251, 0
  %v355 = vsel %vm287, %v252, 0
  %v358 = vsel %vm287, %v253, 0
  %v361 = vsel %vm287, %v254, 0
  %v364 = vsel %vm287, %v255, 0
  %v367 = vsel %vm287, %v256, 0
  %v370 = vsel %vm287, %v257, 0
  %v373 = vsel %vm287, %v258, 0
  %v376 = vsel %vm287, %v259, 0
  %v379 = vsel %vm287, %v260, 0
  %v382 = vsel %vm287, %v261, 0
  %vm384 = vcmask 1041408
  %v386 = vsel %vm384, %v281, 0
  %v389 = vsel %vm384, %v282, 0
  %391 = vmatprep.subr.bf16.mxu0 0
  %392 = vmatpush1.bf16.msra.mxu0 0
  %393 = vmatprep.subr.bf16.mxu0 0
  %394 = vmatpush1.bf16.msra.mxu0 0
  %395 = vmatprep.subr.bf16.mxu0 0
  %396 = vmatpush1.bf16.msra.mxu0 0
  %397 = vmatprep.subr.bf16.mxu0 0
  %398 = vmatpush1.bf16.msra.mxu0 0
  %399 = vmatprep.subr.bf16.mxu0 0
  %400 = vmatpush1.bf16.msra.mxu0 0
  %401 = vmatprep.subr.bf16.mxu0 %v389
  %402 = vmatpush1.bf16.msra.mxu0 %v386
  %403 = vmatprep.subr.bf16.mxu0 %v280
  %404 = vmatpush1.bf16.msra.mxu0 %v279
  %405 = vmatprep.subr.bf16.mxu0 %v278
  %406 = vmatpush1.bf16.msra.mxu0 %v277
  %407 = vmatprep.subr.bf16.mxu0 0
  %408 = vmatpush2.bf16.msra.mxu0 0
  %409 = vmatprep.subr.bf16.mxu0 0
  %410 = vmatpush2.bf16.msra.mxu0 0
  %411 = vmatprep.subr.bf16.mxu0 0
  %412 = vmatpush2.bf16.msra.mxu0 0
  %413 = vmatprep.subr.bf16.mxu0 0
  %414 = vmatpush2.bf16.msra.mxu0 0
  %415 = vmatprep.subr.bf16.mxu0 0
  %416 = vmatpush2.bf16.msra.mxu0 0
  %417 = vmatprep.subr.bf16.mxu0 0
  %418 = vmatpush2.bf16.msra.mxu0 0
  %419 = vmatprep.subr.bf16.mxu0 0
  %420 = vmatpush2.bf16.msra.mxu0 0
  %421 = vmatprep.subr.bf16.mxu0 0
  %422 = vmatpush2.bf16.msra.mxu0 0
  %423 = vmatprep.mubr.bf16.mxu0 0
  %424 = vmatmul.mubr.bf16.gmra.mxu0 %v289
  %v425 = vpop.f32.mrf.mxu0
  %v426 = vadd.f32 %v95, %v425
  %v427 = vpop.f32.mrf.mxu0
  %v428 = vadd.f32 %v99, %v427
  %v429 = vpop.f32.mrf.mxu0
  %v430 = vadd.f32 %v95, %v429
  %v431 = vpop.f32.mrf.mxu0
  %v432 = vadd.f32 %v99, %v431
  %433 = vmatprep.mubr.bf16.mxu0 0
  %434 = vmatmul.mubr.bf16.gmra.mxu0 %v292
  %v435 = vpop.f32.mrf.mxu0
  %v436 = vadd.f32 %v95, %v435
  %v437 = vpop.f32.mrf.mxu0
  %v438 = vadd.f32 %v99, %v437
  %v439 = vpop.f32.mrf.mxu0
  %v440 = vadd.f32 %v95, %v439
  %v441 = vpop.f32.mrf.mxu0
  %v442 = vadd.f32 %v99, %v441
  %443 = vmatprep.mubr.bf16.mxu0 0
  %444 = vmatmul.mubr.bf16.gmra.mxu0 %v295
  %v445 = vpop.f32.mrf.mxu0
  %v446 = vadd.f32 %v95, %v445
  %v447 = vpop.f32.mrf.mxu0
  %v448 = vadd.f32 %v99, %v447
  %v449 = vpop.f32.mrf.mxu0
  %v450 = vadd.f32 %v95, %v449
  %v451 = vpop.f32.mrf.mxu0
  %v452 = vadd.f32 %v99, %v451
  %453 = vmatprep.mubr.bf16.mxu0 0
  %454 = vmatmul.mubr.bf16.gmra.mxu0 %v298
  %v455 = vpop.f32.mrf.mxu0
  %v456 = vadd.f32 %v95, %v455
  %v457 = vpop.f32.mrf.mxu0
  %v458 = vadd.f32 %v99, %v457
  %v459 = vpop.f32.mrf.mxu0
  %v460 = vadd.f32 %v95, %v459
  %v461 = vpop.f32.mrf.mxu0
  %v462 = vadd.f32 %v99, %v461
  %463 = vmatprep.mubr.bf16.mxu0 0
  %464 = vmatmul.mubr.bf16.gmra.mxu0 %v301
  %v465 = vpop.f32.mrf.mxu0
  %v466 = vadd.f32 %v95, %v465
  %v467 = vpop.f32.mrf.mxu0
  %v468 = vadd.f32 %v99, %v467
  %v469 = vpop.f32.mrf.mxu0
  %v470 = vadd.f32 %v95, %v469
  %v471 = vpop.f32.mrf.mxu0
  %v472 = vadd.f32 %v99, %v471
  %473 = vmatprep.mubr.bf16.mxu0 0
  %474 = vmatmul.mubr.bf16.gmra.mxu0 %v304
  %v475 = vpop.f32.mrf.mxu0
  %v476 = vadd.f32 %v95, %v475
  %v477 = vpop.f32.mrf.mxu0
  %v478 = vadd.f32 %v99, %v477
  %v479 = vpop.f32.mrf.mxu0
  %v480 = vadd.f32 %v95, %v479
  %v481 = vpop.f32.mrf.mxu0
  %v482 = vadd.f32 %v99, %v481
  %483 = vmatprep.mubr.bf16.mxu0 0
  %484 = vmatmul.mubr.bf16.gmra.mxu0 %v307
  %v485 = vpop.f32.mrf.mxu0
  %v486 = vadd.f32 %v95, %v485
  %v487 = vpop.f32.mrf.mxu0
  %v488 = vadd.f32 %v99, %v487
  %v489 = vpop.f32.mrf.mxu0
  %v490 = vadd.f32 %v95, %v489
  %v491 = vpop.f32.mrf.mxu0
  %v492 = vadd.f32 %v99, %v491
  %493 = vmatprep.mubr.bf16.mxu0 0
  %494 = vmatmul.mubr.bf16.gmra.mxu0 %v310
  %v495 = vpop.f32.mrf.mxu0
  %v496 = vadd.f32 %v95, %v495
  %v497 = vpop.f32.mrf.mxu0
  %v498 = vadd.f32 %v99, %v497
  %v499 = vpop.f32.mrf.mxu0
  %v500 = vadd.f32 %v95, %v499
  %v501 = vpop.f32.mrf.mxu0
  %v502 = vadd.f32 %v99, %v501
  %503 = vmatprep.mubr.bf16.mxu0 0
  %504 = vmatmul.mubr.bf16.gmra.mxu0 %v313
  %v505 = vpop.f32.mrf.mxu0
  %v506 = vadd.f32 %v95, %v505
  %v507 = vpop.f32.mrf.mxu0
  %v508 = vadd.f32 %v99, %v507
  %v509 = vpop.f32.mrf.mxu0
  %v510 = vadd.f32 %v95, %v509
  %v511 = vpop.f32.mrf.mxu0
  %v512 = vadd.f32 %v99, %v511
  %513 = vmatprep.mubr.bf16.mxu0 0
  %514 = vmatmul.mubr.bf16.gmra.mxu0 %v316
  %v515 = vpop.f32.mrf.mxu0
  %v516 = vadd.f32 %v95, %v515
  %v517 = vpop.f32.mrf.mxu0
  %v518 = vadd.f32 %v99, %v517
  %v519 = vpop.f32.mrf.mxu0
  %v520 = vadd.f32 %v95, %v519
  %v521 = vpop.f32.mrf.mxu0
  %v522 = vadd.f32 %v99, %v521
  %523 = vmatprep.mubr.bf16.mxu0 0
  %524 = vmatmul.mubr.bf16.gmra.mxu0 %v319
  %v525 = vpop.f32.mrf.mxu0
  %v526 = vadd.f32 %v95, %v525
  %v527 = vpop.f32.mrf.mxu0
  %v528 = vadd.f32 %v99, %v527
  %v529 = vpop.f32.mrf.mxu0
  %v530 = vadd.f32 %v95, %v529
  %v531 = vpop.f32.mrf.mxu0
  %v532 = vadd.f32 %v99, %v531
  %533 = vmatprep.mubr.bf16.mxu0 0
  %534 = vmatmul.mubr.bf16.gmra.mxu0 %v322
  %v535 = vpop.f32.mrf.mxu0
  %v536 = vadd.f32 %v95, %v535
  %v537 = vpop.f32.mrf.mxu0
  %v538 = vadd.f32 %v99, %v537
  %v539 = vpop.f32.mrf.mxu0
  %v540 = vadd.f32 %v95, %v539
  %v541 = vpop.f32.mrf.mxu0
  %v542 = vadd.f32 %v99, %v541
  %543 = vmatprep.mubr.bf16.mxu0 0
  %544 = vmatmul.mubr.bf16.gmra.mxu0 %v325
  %v545 = vpop.f32.mrf.mxu0
  %v546 = vadd.f32 %v95, %v545
  %v547 = vpop.f32.mrf.mxu0
  %v548 = vadd.f32 %v99, %v547
  %v549 = vpop.f32.mrf.mxu0
  %v550 = vadd.f32 %v95, %v549
  %v551 = vpop.f32.mrf.mxu0
  %v552 = vadd.f32 %v99, %v551
  %553 = vmatprep.mubr.bf16.mxu0 0
  %554 = vmatmul.mubr.bf16.gmra.mxu0 %v328
  %v555 = vpop.f32.mrf.mxu0
  %v556 = vadd.f32 %v95, %v555
  %v557 = vpop.f32.mrf.mxu0
  %v558 = vadd.f32 %v99, %v557
  %v559 = vpop.f32.mrf.mxu0
  %v560 = vadd.f32 %v95, %v559
  %v561 = vpop.f32.mrf.mxu0
  %v562 = vadd.f32 %v99, %v561
  %563 = vmatprep.mubr.bf16.mxu0 0
  %564 = vmatmul.mubr.bf16.gmra.mxu0 %v331
  %v565 = vpop.f32.mrf.mxu0
  %v566 = vadd.f32 %v95, %v565
  %v567 = vpop.f32.mrf.mxu0
  %v568 = vadd.f32 %v99, %v567
  %v569 = vpop.f32.mrf.mxu0
  %v570 = vadd.f32 %v95, %v569
  %v571 = vpop.f32.mrf.mxu0
  %v572 = vadd.f32 %v99, %v571
  %573 = vmatprep.mubr.bf16.mxu0 0
  %574 = vmatmul.mubr.bf16.gmra.mxu0 %v334
  %v575 = vpop.f32.mrf.mxu0
  %v576 = vadd.f32 %v95, %v575
  %v577 = vpop.f32.mrf.mxu0
  %v578 = vadd.f32 %v99, %v577
  %v579 = vpop.f32.mrf.mxu0
  %v580 = vadd.f32 %v95, %v579
  %v581 = vpop.f32.mrf.mxu0
  %v582 = vadd.f32 %v99, %v581
  %583 = vmatprep.mubr.bf16.mxu0 0
  %584 = vmatmul.mubr.bf16.gmra.mxu0 %v337
  %v585 = vpop.f32.mrf.mxu0
  %v586 = vadd.f32 %v95, %v585
  %v587 = vpop.f32.mrf.mxu0
  %v588 = vadd.f32 %v99, %v587
  %v589 = vpop.f32.mrf.mxu0
  %v590 = vadd.f32 %v95, %v589
  %v591 = vpop.f32.mrf.mxu0
  %v592 = vadd.f32 %v99, %v591
  %593 = vmatprep.mubr.bf16.mxu0 0
  %594 = vmatmul.mubr.bf16.gmra.mxu0 %v340
  %v595 = vpop.f32.mrf.mxu0
  %v596 = vadd.f32 %v95, %v595
  %v597 = vpop.f32.mrf.mxu0
  %v598 = vadd.f32 %v99, %v597
  %v599 = vpop.f32.mrf.mxu0
  %v600 = vadd.f32 %v95, %v599
  %v601 = vpop.f32.mrf.mxu0
  %v602 = vadd.f32 %v99, %v601
  %603 = vmatprep.mubr.bf16.mxu0 0
  %604 = vmatmul.mubr.bf16.gmra.mxu0 %v343
  %v605 = vpop.f32.mrf.mxu0
  %v606 = vadd.f32 %v95, %v605
  %v607 = vpop.f32.mrf.mxu0
  %v608 = vadd.f32 %v99, %v607
  %v609 = vpop.f32.mrf.mxu0
  %v610 = vadd.f32 %v95, %v609
  %v611 = vpop.f32.mrf.mxu0
  %v612 = vadd.f32 %v99, %v611
  %613 = vmatprep.mubr.bf16.mxu0 0
  %614 = vmatmul.mubr.bf16.gmra.mxu0 %v346
  %v615 = vpop.f32.mrf.mxu0
  %v616 = vadd.f32 %v95, %v615
  %v617 = vpop.f32.mrf.mxu0
  %v618 = vadd.f32 %v99, %v617
  %v619 = vpop.f32.mrf.mxu0
  %v620 = vadd.f32 %v95, %v619
  %v621 = vpop.f32.mrf.mxu0
  %v622 = vadd.f32 %v99, %v621
  %623 = vmatprep.mubr.bf16.mxu0 0
  %624 = vmatmul.mubr.bf16.gmra.mxu0 %v349
  %v625 = vpop.f32.mrf.mxu0
  %v626 = vadd.f32 %v95, %v625
  %v627 = vpop.f32.mrf.mxu0
  %v628 = vadd.f32 %v99, %v627
  %v629 = vpop.f32.mrf.mxu0
  %v630 = vadd.f32 %v95, %v629
  %v631 = vpop.f32.mrf.mxu0
  %v632 = vadd.f32 %v99, %v631
  %633 = vmatprep.mubr.bf16.mxu0 0
  %634 = vmatmul.mubr.bf16.gmra.mxu0 %v352
  %v635 = vpop.f32.mrf.mxu0
  %v636 = vadd.f32 %v95, %v635
  %v637 = vpop.f32.mrf.mxu0
  %v638 = vadd.f32 %v99, %v637
  %v639 = vpop.f32.mrf.mxu0
  %v640 = vadd.f32 %v95, %v639
  %v641 = vpop.f32.mrf.mxu0
  %v642 = vadd.f32 %v99, %v641
  %643 = vmatprep.mubr.bf16.mxu0 0
  %644 = vmatmul.mubr.bf16.gmra.mxu0 %v355
  %v645 = vpop.f32.mrf.mxu0
  %v646 = vadd.f32 %v95, %v645
  %v647 = vpop.f32.mrf.mxu0
  %v648 = vadd.f32 %v99, %v647
  %v649 = vpop.f32.mrf.mxu0
  %v650 = vadd.f32 %v95, %v649
  %v651 = vpop.f32.mrf.mxu0
  %v652 = vadd.f32 %v99, %v651
  %653 = vmatprep.mubr.bf16.mxu0 0
  %654 = vmatmul.mubr.bf16.gmra.mxu0 %v358
  %v655 = vpop.f32.mrf.mxu0
  %v656 = vadd.f32 %v95, %v655
  %v657 = vpop.f32.mrf.mxu0
  %v658 = vadd.f32 %v99, %v657
  %v659 = vpop.f32.mrf.mxu0
  %v660 = vadd.f32 %v95, %v659
  %v661 = vpop.f32.mrf.mxu0
  %v662 = vadd.f32 %v99, %v661
  %663 = vmatprep.mubr.bf16.mxu0 0
  %664 = vmatmul.mubr.bf16.gmra.mxu0 %v361
  %v665 = vpop.f32.mrf.mxu0
  %v666 = vadd.f32 %v95, %v665
  %v667 = vpop.f32.mrf.mxu0
  %v668 = vadd.f32 %v99, %v667
  %v669 = vpop.f32.mrf.mxu0
  %v670 = vadd.f32 %v95, %v669
  %v671 = vpop.f32.mrf.mxu0
  %v672 = vadd.f32 %v99, %v671
  %673 = vmatprep.mubr.bf16.mxu0 0
  %674 = vmatmul.mubr.bf16.gmra.mxu0 %v364
  %v675 = vpop.f32.mrf.mxu0
  %v676 = vadd.f32 %v95, %v675
  %v677 = vpop.f32.mrf.mxu0
  %v678 = vadd.f32 %v99, %v677
  %v679 = vpop.f32.mrf.mxu0
  %v680 = vadd.f32 %v95, %v679
  %v681 = vpop.f32.mrf.mxu0
  %v682 = vadd.f32 %v99, %v681
  %683 = vmatprep.mubr.bf16.mxu0 0
  %684 = vmatmul.mubr.bf16.gmra.mxu0 %v367
  %v685 = vpop.f32.mrf.mxu0
  %v686 = vadd.f32 %v95, %v685
  %v687 = vpop.f32.mrf.mxu0
  %v688 = vadd.f32 %v99, %v687
  %v689 = vpop.f32.mrf.mxu0
  %v690 = vadd.f32 %v95, %v689
  %v691 = vpop.f32.mrf.mxu0
  %v692 = vadd.f32 %v99, %v691
  %693 = vmatprep.mubr.bf16.mxu0 0
  %694 = vmatmul.mubr.bf16.gmra.mxu0 %v370
  %v695 = vpop.f32.mrf.mxu0
  %v696 = vadd.f32 %v95, %v695
  %v697 = vpop.f32.mrf.mxu0
  %v698 = vadd.f32 %v99, %v697
  %v699 = vpop.f32.mrf.mxu0
  %v700 = vadd.f32 %v95, %v699
  %v701 = vpop.f32.mrf.mxu0
  %v702 = vadd.f32 %v99, %v701
  %703 = vmatprep.mubr.bf16.mxu0 0
  %704 = vmatmul.mubr.bf16.gmra.mxu0 %v373
  %v705 = vpop.f32.mrf.mxu0
  %v706 = vadd.f32 %v95, %v705
  %v707 = vpop.f32.mrf.mxu0
  %v708 = vadd.f32 %v99, %v707
  %v709 = vpop.f32.mrf.mxu0
  %v710 = vadd.f32 %v95, %v709
  %v711 = vpop.f32.mrf.mxu0
  %v712 = vadd.f32 %v99, %v711
  %713 = vmatprep.mubr.bf16.mxu0 0
  %714 = vmatmul.mubr.bf16.gmra.mxu0 %v376
  %v715 = vpop.f32.mrf.mxu0
  %v716 = vadd.f32 %v95, %v715
  %v717 = vpop.f32.mrf.mxu0
  %v718 = vadd.f32 %v99, %v717
  %v719 = vpop.f32.mrf.mxu0
  %v720 = vadd.f32 %v95, %v719
  %v721 = vpop.f32.mrf.mxu0
  %v722 = vadd.f32 %v99, %v721
  %723 = vmatprep.mubr.bf16.mxu0 0
  %724 = vmatmul.mubr.bf16.gmra.mxu0 %v379
  %v725 = vpop.f32.mrf.mxu0
  %v726 = vadd.f32 %v95, %v725
  %v727 = vpop.f32.mrf.mxu0
  %v728 = vadd.f32 %v99, %v727
  %v729 = vpop.f32.mrf.mxu0
  %v730 = vadd.f32 %v95, %v729
  %v731 = vpop.f32.mrf.mxu0
  %v732 = vadd.f32 %v99, %v731
  %733 = vmatprep.mubr.bf16.mxu0 0
  %734 = vmatmul.mubr.bf16.gmra.mxu0 %v382
  %v735 = vpop.f32.mrf.mxu0
  %v736 = vadd.f32 %v95, %v735
  %v737 = vpop.f32.mrf.mxu0
  %v738 = vadd.f32 %v99, %v737
  %v739 = vpop.f32.mrf.mxu0
  %v740 = vadd.f32 %v95, %v739
  %v741 = vpop.f32.mrf.mxu0
  %v742 = vadd.f32 %v99, %v741
  %743 = vdwg.mxu0
  %vm744 = vcmp.ge.f32.partialorder %v426, 0.0
  %vm745 = vcmp.ge.f32.partialorder %v430, 0.0
  %vm746 = vcmp.ge.f32.partialorder %v436, 0.0
  %vm747 = vcmp.ge.f32.partialorder %v440, 0.0
  %vm748 = vcmp.ge.f32.partialorder %v446, 0.0
  %vm749 = vcmp.ge.f32.partialorder %v450, 0.0
  %vm750 = vcmp.ge.f32.partialorder %v456, 0.0
  %vm751 = vcmp.ge.f32.partialorder %v460, 0.0
  %vm752 = vcmp.ge.f32.partialorder %v466, 0.0
  %vm753 = vcmp.ge.f32.partialorder %v470, 0.0
  %vm754 = vcmp.ge.f32.partialorder %v476, 0.0
  %vm755 = vcmp.ge.f32.partialorder %v480, 0.0
  %vm756 = vcmp.ge.f32.partialorder %v486, 0.0
  %vm757 = vcmp.ge.f32.partialorder %v490, 0.0
  %vm758 = vcmp.ge.f32.partialorder %v496, 0.0
  %vm759 = vcmp.ge.f32.partialorder %v500, 0.0
  %vm760 = vcmp.ge.f32.partialorder %v506, 0.0
  %vm761 = vcmp.ge.f32.partialorder %v510, 0.0
  %vm762 = vcmp.ge.f32.partialorder %v516, 0.0
  %vm763 = vcmp.ge.f32.partialorder %v520, 0.0
  %vm764 = vcmp.ge.f32.partialorder %v526, 0.0
  %vm765 = vcmp.ge.f32.partialorder %v530, 0.0
  %vm766 = vcmp.ge.f32.partialorder %v536, 0.0
  %vm767 = vcmp.ge.f32.partialorder %v540, 0.0
  %vm768 = vcmp.ge.f32.partialorder %v546, 0.0
  %vm769 = vcmp.ge.f32.partialorder %v550, 0.0
  %vm770 = vcmp.ge.f32.partialorder %v556, 0.0
  %vm771 = vcmp.ge.f32.partialorder %v560, 0.0
  %vm772 = vcmp.ge.f32.partialorder %v566, 0.0
  %vm773 = vcmp.ge.f32.partialorder %v570, 0.0
  %vm774 = vcmp.ge.f32.partialorder %v576, 0.0
  %vm775 = vcmp.ge.f32.partialorder %v580, 0.0
  %vm776 = vcmp.ge.f32.partialorder %v586, 0.0
  %vm777 = vcmp.ge.f32.partialorder %v590, 0.0
  %vm778 = vcmp.ge.f32.partialorder %v596, 0.0
  %vm779 = vcmp.ge.f32.partialorder %v600, 0.0
  %vm780 = vcmp.ge.f32.partialorder %v606, 0.0
  %vm781 = vcmp.ge.f32.partialorder %v610, 0.0
  %vm782 = vcmp.ge.f32.partialorder %v616, 0.0
  %vm783 = vcmp.ge.f32.partialorder %v620, 0.0
  %vm784 = vcmp.ge.f32.partialorder %v626, 0.0
  %vm785 = vcmp.ge.f32.partialorder %v630, 0.0
  %vm786 = vcmp.ge.f32.partialorder %v636, 0.0
  %vm787 = vcmp.ge.f32.partialorder %v640, 0.0
  %vm788 = vcmp.ge.f32.partialorder %v646, 0.0
  %vm789 = vcmp.ge.f32.partialorder %v650, 0.0
  %vm790 = vcmp.ge.f32.partialorder %v656, 0.0
  %vm791 = vcmp.ge.f32.partialorder %v660, 0.0
  %vm792 = vcmp.ge.f32.partialorder %v666, 0.0
  %vm793 = vcmp.ge.f32.partialorder %v670, 0.0
  %vm794 = vcmp.ge.f32.partialorder %v676, 0.0
  %vm795 = vcmp.ge.f32.partialorder %v680, 0.0
  %vm796 = vcmp.ge.f32.partialorder %v686, 0.0
  %vm797 = vcmp.ge.f32.partialorder %v690, 0.0
  %vm798 = vcmp.ge.f32.partialorder %v696, 0.0
  %vm799 = vcmp.ge.f32.partialorder %v700, 0.0
  %vm800 = vcmp.ge.f32.partialorder %v706, 0.0
  %vm801 = vcmp.ge.f32.partialorder %v710, 0.0
  %vm802 = vcmp.ge.f32.partialorder %v716, 0.0
  %vm803 = vcmp.ge.f32.partialorder %v720, 0.0
  %vm804 = vcmp.ge.f32.partialorder %v726, 0.0
  %vm805 = vcmp.ge.f32.partialorder %v730, 0.0
  %vm806 = vcmp.ge.f32.partialorder %v736, 0.0
  %vm807 = vcmp.ge.f32.partialorder %v740, 0.0
  %v808 = vmul.f32 %v426, 0.2
  %v809 = vmul.f32 %v430, 0.2
  %v810 = vmul.f32 %v436, 0.2
  %v811 = vmul.f32 %v440, 0.2
  %v812 = vmul.f32 %v446, 0.2
  %v813 = vmul.f32 %v450, 0.2
  %v814 = vmul.f32 %v456, 0.2
  %v815 = vmul.f32 %v460, 0.2
  %v816 = vmul.f32 %v466, 0.2
  %v817 = vmul.f32 %v470, 0.2
  %v818 = vmul.f32 %v476, 0.2
  %v819 = vmul.f32 %v480, 0.2
  %v820 = vmul.f32 %v486, 0.2
  %v821 = vmul.f32 %v490, 0.2
  %v822 = vmul.f32 %v496, 0.2
  %v823 = vmul.f32 %v500, 0.2
  %v824 = vmul.f32 %v506, 0.2
  %v825 = vmul.f32 %v510, 0.2
  %v826 = vmul.f32 %v516, 0.2
  %v827 = vmul.f32 %v520, 0.2
  %v828 = vmul.f32 %v526, 0.2
  %v829 = vmul.f32 %v530, 0.2
  %v830 = vmul.f32 %v536, 0.2
  %v831 = vmul.f32 %v540, 0.2
  %v832 = vmul.f32 %v546, 0.2
  %v833 = vmul.f32 %v550, 0.2
  %v834 = vmul.f32 %v556, 0.2
  %v835 = vmul.f32 %v560, 0.2
  %v836 = vmul.f32 %v566, 0.2
  %v837 = vmul.f32 %v570, 0.2
  %v838 = vmul.f32 %v576, 0.2
  %v839 = vmul.f32 %v580, 0.2
  %v840 = vmul.f32 %v586, 0.2
  %v841 = vmul.f32 %v590, 0.2
  %v842 = vmul.f32 %v596, 0.2
  %v843 = vmul.f32 %v600, 0.2
  %v844 = vmul.f32 %v606, 0.2
  %v845 = vmul.f32 %v610, 0.2
  %v846 = vmul.f32 %v616, 0.2
  %v847 = vmul.f32 %v620, 0.2
  %v848 = vmul.f32 %v626, 0.2
  %v849 = vmul.f32 %v630, 0.2
  %v850 = vmul.f32 %v636, 0.2
  %v851 = vmul.f32 %v640, 0.2
  %v852 = vmul.f32 %v646, 0.2
  %v853 = vmul.f32 %v650, 0.2
  %v854 = vmul.f32 %v656, 0.2
  %v855 = vmul.f32 %v660, 0.2
  %v856 = vmul.f32 %v666, 0.2
  %v857 = vmul.f32 %v670, 0.2
  %v858 = vmul.f32 %v676, 0.2
  %v859 = vmul.f32 %v680, 0.2
  %v860 = vmul.f32 %v686, 0.2
  %v861 = vmul.f32 %v690, 0.2
  %v862 = vmul.f32 %v696, 0.2
  %v863 = vmul.f32 %v700, 0.2
  %v864 = vmul.f32 %v706, 0.2
  %v865 = vmul.f32 %v710, 0.2
  %v866 = vmul.f32 %v716, 0.2
  %v867 = vmul.f32 %v720, 0.2
  %v868 = vmul.f32 %v726, 0.2
  %v869 = vmul.f32 %v730, 0.2
  %v870 = vmul.f32 %v736, 0.2
  %v871 = vmul.f32 %v740, 0.2
  %v872 = vsel %vm744, %v426, %v808
  %v873 = vsel %vm745, %v430, %v809
  %v874 = vsel %vm746, %v436, %v810
  %v875 = vsel %vm747, %v440, %v811
  %v876 = vsel %vm748, %v446, %v812
  %v877 = vsel %vm749, %v450, %v813
  %v878 = vsel %vm750, %v456, %v814
  %v879 = vsel %vm751, %v460, %v815
  %v880 = vsel %vm752, %v466, %v816
  %v881 = vsel %vm753, %v470, %v817
  %v882 = vsel %vm754, %v476, %v818
  %v883 = vsel %vm755, %v480, %v819
  %v884 = vsel %vm756, %v486, %v820
  %v885 = vsel %vm757, %v490, %v821
  %v886 = vsel %vm758, %v496, %v822
  %v887 = vsel %vm759, %v500, %v823
  %v888 = vsel %vm760, %v506, %v824
  %v889 = vsel %vm761, %v510, %v825
  %v890 = vsel %vm762, %v516, %v826
  %v891 = vsel %vm763, %v520, %v827
  %v892 = vsel %vm764, %v526, %v828
  %v893 = vsel %vm765, %v530, %v829
  %v894 = vsel %vm766, %v536, %v830
  %v895 = vsel %vm767, %v540, %v831
  %v896 = vsel %vm768, %v546, %v832
  %v897 = vsel %vm769, %v550, %v833
  %v898 = vsel %vm770, %v556, %v834
  %v899 = vsel %vm771, %v560, %v835
  %v900 = vsel %vm772, %v566, %v836
  %v901 = vsel %vm773, %v570, %v837
  %v902 = vsel %vm774, %v576, %v838
  %v903 = vsel %vm775, %v580, %v839
  %v904 = vsel %vm776, %v586, %v840
  %v905 = vsel %vm777, %v590, %v841
  %v906 = vsel %vm778, %v596, %v842
  %v907 = vsel %vm779, %v600, %v843
  %v908 = vsel %vm780, %v606, %v844
  %v909 = vsel %vm781, %v610, %v845
  %v910 = vsel %vm782, %v616, %v846
  %v911 = vsel %vm783, %v620, %v847
  %v912 = vsel %vm784, %v626, %v848
  %v913 = vsel %vm785, %v630, %v849
  %v914 = vsel %vm786, %v636, %v850
  %v915 = vsel %vm787, %v640, %v851
  %v916 = vsel %vm788, %v646, %v852
  %v917 = vsel %vm789, %v650, %v853
  %v918 = vsel %vm790, %v656, %v854
  %v919 = vsel %vm791, %v660, %v855
  %v920 = vsel %vm792, %v666, %v856
  %v921 = vsel %vm793, %v670, %v857
  %v922 = vsel %vm794, %v676, %v858
  %v923 = vsel %vm795, %v680, %v859
  %v924 = vsel %vm796, %v686, %v860
  %v925 = vsel %vm797, %v690, %v861
  %v926 = vsel %vm798, %v696, %v862
  %v927 = vsel %vm799, %v700, %v863
  %v928 = vsel %vm800, %v706, %v864
  %v929 = vsel %vm801, %v710, %v865
  %v930 = vsel %vm802, %v716, %v866
  %v931 = vsel %vm803, %v720, %v867
  %v932 = vsel %vm804, %v726, %v868
  %v933 = vsel %vm805, %v730, %v869
  %v934 = vsel %vm806, %v736, %v870
  %v935 = vsel %vm807, %v740, %v871
  %v936 = vsub.f32 0.0, %v428
  %v937 = vsub.f32 0.0, %v432
  %v938 = vsub.f32 0.0, %v438
  %v939 = vsub.f32 0.0, %v442
  %v940 = vsub.f32 0.0, %v448
  %v941 = vsub.f32 0.0, %v452
  %v942 = vsub.f32 0.0, %v458
  %v943 = vsub.f32 0.0, %v462
  %v944 = vsub.f32 0.0, %v468
  %v945 = vsub.f32 0.0, %v472
  %v946 = vsub.f32 0.0, %v478
  %v947 = vsub.f32 0.0, %v482
  %v948 = vsub.f32 0.0, %v488
  %v949 = vsub.f32 0.0, %v492
  %v950 = vsub.f32 0.0, %v498
  %v951 = vsub.f32 0.0, %v502
  %v952 = vsub.f32 0.0, %v508
  %v953 = vsub.f32 0.0, %v512
  %v954 = vsub.f32 0.0, %v518
  %v955 = vsub.f32 0.0, %v522
  %v956 = vsub.f32 0.0, %v528
  %v957 = vsub.f32 0.0, %v532
  %v958 = vsub.f32 0.0, %v538
  %v959 = vsub.f32 0.0, %v542
  %v960 = vsub.f32 0.0, %v548
  %v961 = vsub.f32 0.0, %v552
  %v962 = vsub.f32 0.0, %v558
  %v963 = vsub.f32 0.0, %v562
  %v964 = vsub.f32 0.0, %v568
  %v965 = vsub.f32 0.0, %v572
  %v966 = vsub.f32 0.0, %v578
  %v967 = vsub.f32 0.0, %v582
  %v968 = vsub.f32 0.0, %v588
  %v969 = vsub.f32 0.0, %v592
  %v970 = vsub.f32 0.0, %v598
  %v971 = vsub.f32 0.0, %v602
  %v972 = vsub.f32 0.0, %v608
  %v973 = vsub.f32 0.0, %v612
  %v974 = vsub.f32 0.0, %v618
  %v975 = vsub.f32 0.0, %v622
  %v976 = vsub.f32 0.0, %v628
  %v977 = vsub.f32 0.0, %v632
  %v978 = vsub.f32 0.0, %v638
  %v979 = vsub.f32 0.0, %v642
  %v980 = vsub.f32 0.0, %v648
  %v981 = vsub.f32 0.0, %v652
  %v982 = vsub.f32 0.0, %v658
  %v983 = vsub.f32 0.0, %v662
  %v984 = vsub.f32 0.0, %v668
  %v985 = vsub.f32 0.0, %v672
  %v986 = vsub.f32 0.0, %v678
  %v987 = vsub.f32 0.0, %v682
  %v988 = vsub.f32 0.0, %v688
  %v989 = vsub.f32 0.0, %v692
  %v990 = vsub.f32 0.0, %v698
  %v991 = vsub.f32 0.0, %v702
  %v992 = vsub.f32 0.0, %v708
  %v993 = vsub.f32 0.0, %v712
  %v994 = vsub.f32 0.0, %v718
  %v995 = vsub.f32 0.0, %v722
  %v996 = vsub.f32 0.0, %v728
  %v997 = vsub.f32 0.0, %v732
  %v998 = vsub.f32 0.0, %v738
  %v999 = vsub.f32 0.0, %v742
  %v1000 = vmul.f32 %v936, 1.442695
  %v1001 = vpow.pop %v1000
  %v1002 = vmul.f32 %v937, 1.442695
  %v1003 = vpow.pop %v1002
  %v1004 = vmul.f32 %v938, 1.442695
  %v1005 = vpow.pop %v1004
  %v1006 = vmul.f32 %v939, 1.442695
  %v1007 = vpow.pop %v1006
  %v1008 = vmul.f32 %v940, 1.442695
  %v1009 = vpow.pop %v1008
  %v1010 = vmul.f32 %v941, 1.442695
  %v1011 = vpow.pop %v1010
  %v1012 = vmul.f32 %v942, 1.442695
  %v1013 = vpow.pop %v1012
  %v1014 = vmul.f32 %v943, 1.442695
  %v1015 = vpow.pop %v1014
  %v1016 = vmul.f32 %v944, 1.442695
  %v1017 = vpow.pop %v1016
  %v1018 = vmul.f32 %v945, 1.442695
  %v1019 = vpow.pop %v1018
  %v1020 = vmul.f32 %v946, 1.442695
  %v1021 = vpow.pop %v1020
  %v1022 = vmul.f32 %v947, 1.442695
  %v1023 = vpow.pop %v1022
  %v1024 = vmul.f32 %v948, 1.442695
  %v1025 = vpow.pop %v1024
  %v1026 = vmul.f32 %v949, 1.442695
  %v1027 = vpow.pop %v1026
  %v1028 = vmul.f32 %v950, 1.442695
  %v1029 = vpow.pop %v1028
  %v1030 = vmul.f32 %v951, 1.442695
  %v1031 = vpow.pop %v1030
  %v1032 = vmul.f32 %v952, 1.442695
  %v1033 = vpow.pop %v1032
  %v1034 = vmul.f32 %v953, 1.442695
  %v1035 = vpow.pop %v1034
  %v1036 = vmul.f32 %v954, 1.442695
  %v1037 = vpow.pop %v1036
  %v1038 = vmul.f32 %v955, 1.442695
  %v1039 = vpow.pop %v1038
  %v1040 = vmul.f32 %v956, 1.442695
  %v1041 = vpow.pop %v1040
  %v1042 = vmul.f32 %v957, 1.442695
  %v1043 = vpow.pop %v1042
  %v1044 = vmul.f32 %v958, 1.442695
  %v1045 = vpow.pop %v1044
  %v1046 = vmul.f32 %v959, 1.442695
  %v1047 = vpow.pop %v1046
  %v1048 = vmul.f32 %v960, 1.442695
  %v1049 = vpow.pop %v1048
  %v1050 = vmul.f32 %v961, 1.442695
  %v1051 = vpow.pop %v1050
  %v1052 = vmul.f32 %v962, 1.442695
  %v1053 = vpow.pop %v1052
  %v1054 = vmul.f32 %v963, 1.442695
  %v1055 = vpow.pop %v1054
  %v1056 = vmul.f32 %v964, 1.442695
  %v1057 = vpow.pop %v1056
  %v1058 = vmul.f32 %v965, 1.442695
  %v1059 = vpow.pop %v1058
  %v1060 = vmul.f32 %v966, 1.442695
  %v1061 = vpow.pop %v1060
  %v1062 = vmul.f32 %v967, 1.442695
  %v1063 = vpow.pop %v1062
  %v1064 = vmul.f32 %v968, 1.442695
  %v1065 = vpow.pop %v1064
  %v1066 = vmul.f32 %v969, 1.442695
  %v1067 = vpow.pop %v1066
  %v1068 = vmul.f32 %v970, 1.442695
  %v1069 = vpow.pop %v1068
  %v1070 = vmul.f32 %v971, 1.442695
  %v1071 = vpow.pop %v1070
  %v1072 = vmul.f32 %v972, 1.442695
  %v1073 = vpow.pop %v1072
  %v1074 = vmul.f32 %v973, 1.442695
  %v1075 = vpow.pop %v1074
  %v1076 = vmul.f32 %v974, 1.442695
  %v1077 = vpow.pop %v1076
  %v1078 = vmul.f32 %v975, 1.442695
  %v1079 = vpow.pop %v1078
  %v1080 = vmul.f32 %v976, 1.442695
  %v1081 = vpow.pop %v1080
  %v1082 = vmul.f32 %v977, 1.442695
  %v1083 = vpow.pop %v1082
  %v1084 = vmul.f32 %v978, 1.442695
  %v1085 = vpow.pop %v1084
  %v1086 = vmul.f32 %v979, 1.442695
  %v1087 = vpow.pop %v1086
  %v1088 = vmul.f32 %v980, 1.442695
  %v1089 = vpow.pop %v1088
  %v1090 = vmul.f32 %v981, 1.442695
  %v1091 = vpow.pop %v1090
  %v1092 = vmul.f32 %v982, 1.442695
  %v1093 = vpow.pop %v1092
  %v1094 = vmul.f32 %v983, 1.442695
  %v1095 = vpow.pop %v1094
  %v1096 = vmul.f32 %v984, 1.442695
  %v1097 = vpow.pop %v1096
  %v1098 = vmul.f32 %v985, 1.442695
  %v1099 = vpow.pop %v1098
  %v1100 = vmul.f32 %v986, 1.442695
  %v1101 = vpow.pop %v1100
  %v1102 = vmul.f32 %v987, 1.442695
  %v1103 = vpow.pop %v1102
  %v1104 = vmul.f32 %v988, 1.442695
  %v1105 = vpow.pop %v1104
  %v1106 = vmul.f32 %v989, 1.442695
  %v1107 = vpow.pop %v1106
  %v1108 = vmul.f32 %v990, 1.442695
  %v1109 = vpow.pop %v1108
  %v1110 = vmul.f32 %v991, 1.442695
  %v1111 = vpow.pop %v1110
  %v1112 = vmul.f32 %v992, 1.442695
  %v1113 = vpow.pop %v1112
  %v1114 = vmul.f32 %v993, 1.442695
  %v1115 = vpow.pop %v1114
  %v1116 = vmul.f32 %v994, 1.442695
  %v1117 = vpow.pop %v1116
  %v1118 = vmul.f32 %v995, 1.442695
  %v1119 = vpow.pop %v1118
  %v1120 = vmul.f32 %v996, 1.442695
  %v1121 = vpow.pop %v1120
  %v1122 = vmul.f32 %v997, 1.442695
  %v1123 = vpow.pop %v1122
  %v1124 = vmul.f32 %v998, 1.442695
  %v1125 = vpow.pop %v1124
  %v1126 = vmul.f32 %v999, 1.442695
  %v1127 = vpow.pop %v1126
  %v1128 = vadd.f32 %v1001, 1.0
  %v1129 = vadd.f32 %v1003, 1.0
  %v1130 = vadd.f32 %v1005, 1.0
  %v1131 = vadd.f32 %v1007, 1.0
  %v1132 = vadd.f32 %v1009, 1.0
  %v1133 = vadd.f32 %v1011, 1.0
  %v1134 = vadd.f32 %v1013, 1.0
  %v1135 = vadd.f32 %v1015, 1.0
  %v1136 = vadd.f32 %v1017, 1.0
  %v1137 = vadd.f32 %v1019, 1.0
  %v1138 = vadd.f32 %v1021, 1.0
  %v1139 = vadd.f32 %v1023, 1.0
  %v1140 = vadd.f32 %v1025, 1.0
  %v1141 = vadd.f32 %v1027, 1.0
  %v1142 = vadd.f32 %v1029, 1.0
  %v1143 = vadd.f32 %v1031, 1.0
  %v1144 = vadd.f32 %v1033, 1.0
  %v1145 = vadd.f32 %v1035, 1.0
  %v1146 = vadd.f32 %v1037, 1.0
  %v1147 = vadd.f32 %v1039, 1.0
  %v1148 = vadd.f32 %v1041, 1.0
  %v1149 = vadd.f32 %v1043, 1.0
  %v1150 = vadd.f32 %v1045, 1.0
  %v1151 = vadd.f32 %v1047, 1.0
  %v1152 = vadd.f32 %v1049, 1.0
  %v1153 = vadd.f32 %v1051, 1.0
  %v1154 = vadd.f32 %v1053, 1.0
  %v1155 = vadd.f32 %v1055, 1.0
  %v1156 = vadd.f32 %v1057, 1.0
  %v1157 = vadd.f32 %v1059, 1.0
  %v1158 = vadd.f32 %v1061, 1.0
  %v1159 = vadd.f32 %v1063, 1.0
  %v1160 = vadd.f32 %v1065, 1.0
  %v1161 = vadd.f32 %v1067, 1.0
  %v1162 = vadd.f32 %v1069, 1.0
  %v1163 = vadd.f32 %v1071, 1.0
  %v1164 = vadd.f32 %v1073, 1.0
  %v1165 = vadd.f32 %v1075, 1.0
  %v1166 = vadd.f32 %v1077, 1.0
  %v1167 = vadd.f32 %v1079, 1.0
  %v1168 = vadd.f32 %v1081, 1.0
  %v1169 = vadd.f32 %v1083, 1.0
  %v1170 = vadd.f32 %v1085, 1.0
  %v1171 = vadd.f32 %v1087, 1.0
  %v1172 = vadd.f32 %v1089, 1.0
  %v1173 = vadd.f32 %v1091, 1.0
  %v1174 = vadd.f32 %v1093, 1.0
  %v1175 = vadd.f32 %v1095, 1.0
  %v1176 = vadd.f32 %v1097, 1.0
  %v1177 = vadd.f32 %v1099, 1.0
  %v1178 = vadd.f32 %v1101, 1.0
  %v1179 = vadd.f32 %v1103, 1.0
  %v1180 = vadd.f32 %v1105, 1.0
  %v1181 = vadd.f32 %v1107, 1.0
  %v1182 = vadd.f32 %v1109, 1.0
  %v1183 = vadd.f32 %v1111, 1.0
  %v1184 = vadd.f32 %v1113, 1.0
  %v1185 = vadd.f32 %v1115, 1.0
  %v1186 = vadd.f32 %v1117, 1.0
  %v1187 = vadd.f32 %v1119, 1.0
  %v1188 = vadd.f32 %v1121, 1.0
  %v1189 = vadd.f32 %v1123, 1.0
  %v1190 = vadd.f32 %v1125, 1.0
  %v1191 = vadd.f32 %v1127, 1.0
  %v1192 = vrcp.pop %v1128
  %v1193 = vmul.f32 1.0, %v1192
  %v1194 = vrcp.pop %v1129
  %v1195 = vmul.f32 1.0, %v1194
  %v1196 = vrcp.pop %v1130
  %v1197 = vmul.f32 1.0, %v1196
  %v1198 = vrcp.pop %v1131
  %v1199 = vmul.f32 1.0, %v1198
  %v1200 = vrcp.pop %v1132
  %v1201 = vmul.f32 1.0, %v1200
  %v1202 = vrcp.pop %v1133
  %v1203 = vmul.f32 1.0, %v1202
  %v1204 = vrcp.pop %v1134
  %v1205 = vmul.f32 1.0, %v1204
  %v1206 = vrcp.pop %v1135
  %v1207 = vmul.f32 1.0, %v1206
  %v1208 = vrcp.pop %v1136
  %v1209 = vmul.f32 1.0, %v1208
  %v1210 = vrcp.pop %v1137
  %v1211 = vmul.f32 1.0, %v1210
  %v1212 = vrcp.pop %v1138
  %v1213 = vmul.f32 1.0, %v1212
  %v1214 = vrcp.pop %v1139
  %v1215 = vmul.f32 1.0, %v1214
  %v1216 = vrcp.pop %v1140
  %v1217 = vmul.f32 1.0, %v1216
  %v1218 = vrcp.pop %v1141
  %v1219 = vmul.f32 1.0, %v1218
  %v1220 = vrcp.pop %v1142
  %v1221 = vmul.f32 1.0, %v1220
  %v1222 = vrcp.pop %v1143
  %v1223 = vmul.f32 1.0, %v1222
  %v1224 = vrcp.pop %v1144
  %v1225 = vmul.f32 1.0, %v1224
  %v1226 = vrcp.pop %v1145
  %v1227 = vmul.f32 1.0, %v1226
  %v1228 = vrcp.pop %v1146
  %v1229 = vmul.f32 1.0, %v1228
  %v1230 = vrcp.pop %v1147
  %v1231 = vmul.f32 1.0, %v1230
  %v1232 = vrcp.pop %v1148
  %v1233 = vmul.f32 1.0, %v1232
  %v1234 = vrcp.pop %v1149
  %v1235 = vmul.f32 1.0, %v1234
  %v1236 = vrcp.pop %v1150
  %v1237 = vmul.f32 1.0, %v1236
  %v1238 = vrcp.pop %v1151
  %v1239 = vmul.f32 1.0, %v1238
  %v1240 = vrcp.pop %v1152
  %v1241 = vmul.f32 1.0, %v1240
  %v1242 = vrcp.pop %v1153
  %v1243 = vmul.f32 1.0, %v1242
  %v1244 = vrcp.pop %v1154
  %v1245 = vmul.f32 1.0, %v1244
  %v1246 = vrcp.pop %v1155
  %v1247 = vmul.f32 1.0, %v1246
  %v1248 = vrcp.pop %v1156
  %v1249 = vmul.f32 1.0, %v1248
  %v1250 = vrcp.pop %v1157
  %v1251 = vmul.f32 1.0, %v1250
  %v1252 = vrcp.pop %v1158
  %v1253 = vmul.f32 1.0, %v1252
  %v1254 = vrcp.pop %v1159
  %v1255 = vmul.f32 1.0, %v1254
  %v1256 = vrcp.pop %v1160
  %v1257 = vmul.f32 1.0, %v1256
  %v1258 = vrcp.pop %v1161
  %v1259 = vmul.f32 1.0, %v1258
  %v1260 = vrcp.pop %v1162
  %v1261 = vmul.f32 1.0, %v1260
  %v1262 = vrcp.pop %v1163
  %v1263 = vmul.f32 1.0, %v1262
  %v1264 = vrcp.pop %v1164
  %v1265 = vmul.f32 1.0, %v1264
  %v1266 = vrcp.pop %v1165
  %v1267 = vmul.f32 1.0, %v1266
  %v1268 = vrcp.pop %v1166
  %v1269 = vmul.f32 1.0, %v1268
  %v1270 = vrcp.pop %v1167
  %v1271 = vmul.f32 1.0, %v1270
  %v1272 = vrcp.pop %v1168
  %v1273 = vmul.f32 1.0, %v1272
  %v1274 = vrcp.pop %v1169
  %v1275 = vmul.f32 1.0, %v1274
  %v1276 = vrcp.pop %v1170
  %v1277 = vmul.f32 1.0, %v1276
  %v1278 = vrcp.pop %v1171
  %v1279 = vmul.f32 1.0, %v1278
  %v1280 = vrcp.pop %v1172
  %v1281 = vmul.f32 1.0, %v1280
  %v1282 = vrcp.pop %v1173
  %v1283 = vmul.f32 1.0, %v1282
  %v1284 = vrcp.pop %v1174
  %v1285 = vmul.f32 1.0, %v1284
  %v1286 = vrcp.pop %v1175
  %v1287 = vmul.f32 1.0, %v1286
  %v1288 = vrcp.pop %v1176
  %v1289 = vmul.f32 1.0, %v1288
  %v1290 = vrcp.pop %v1177
  %v1291 = vmul.f32 1.0, %v1290
  %v1292 = vrcp.pop %v1178
  %v1293 = vmul.f32 1.0, %v1292
  %v1294 = vrcp.pop %v1179
  %v1295 = vmul.f32 1.0, %v1294
  %v1296 = vrcp.pop %v1180
  %v1297 = vmul.f32 1.0, %v1296
  %v1298 = vrcp.pop %v1181
  %v1299 = vmul.f32 1.0, %v1298
  %v1300 = vrcp.pop %v1182
  %v1301 = vmul.f32 1.0, %v1300
  %v1302 = vrcp.pop %v1183
  %v1303 = vmul.f32 1.0, %v1302
  %v1304 = vrcp.pop %v1184
  %v1305 = vmul.f32 1.0, %v1304
  %v1306 = vrcp.pop %v1185
  %v1307 = vmul.f32 1.0, %v1306
  %v1308 = vrcp.pop %v1186
  %v1309 = vmul.f32 1.0, %v1308
  %v1310 = vrcp.pop %v1187
  %v1311 = vmul.f32 1.0, %v1310
  %v1312 = vrcp.pop %v1188
  %v1313 = vmul.f32 1.0, %v1312
  %v1314 = vrcp.pop %v1189
  %v1315 = vmul.f32 1.0, %v1314
  %v1316 = vrcp.pop %v1190
  %v1317 = vmul.f32 1.0, %v1316
  %v1318 = vrcp.pop %v1191
  %v1319 = vmul.f32 1.0, %v1318
  %v1320 = vmul.f32 %v872, %v1193
  %v1321 = vmul.f32 %v873, %v1195
  %v1322 = vmul.f32 %v874, %v1197
  %v1323 = vmul.f32 %v875, %v1199
  %v1324 = vmul.f32 %v876, %v1201
  %v1325 = vmul.f32 %v877, %v1203
  %v1326 = vmul.f32 %v878, %v1205
  %v1327 = vmul.f32 %v879, %v1207
  %v1328 = vmul.f32 %v880, %v1209
  %v1329 = vmul.f32 %v881, %v1211
  %v1330 = vmul.f32 %v882, %v1213
  %v1331 = vmul.f32 %v883, %v1215
  %v1332 = vmul.f32 %v884, %v1217
  %v1333 = vmul.f32 %v885, %v1219
  %v1334 = vmul.f32 %v886, %v1221
  %v1335 = vmul.f32 %v887, %v1223
  %v1336 = vmul.f32 %v888, %v1225
  %v1337 = vmul.f32 %v889, %v1227
  %v1338 = vmul.f32 %v890, %v1229
  %v1339 = vmul.f32 %v891, %v1231
  %v1340 = vmul.f32 %v892, %v1233
  %v1341 = vmul.f32 %v893, %v1235
  %v1342 = vmul.f32 %v894, %v1237
  %v1343 = vmul.f32 %v895, %v1239
  %v1344 = vmul.f32 %v896, %v1241
  %v1345 = vmul.f32 %v897, %v1243
  %v1346 = vmul.f32 %v898, %v1245
  %v1347 = vmul.f32 %v899, %v1247
  %v1348 = vmul.f32 %v900, %v1249
  %v1349 = vmul.f32 %v901, %v1251
  %v1350 = vmul.f32 %v902, %v1253
  %v1351 = vmul.f32 %v903, %v1255
  %v1352 = vmul.f32 %v904, %v1257
  %v1353 = vmul.f32 %v905, %v1259
  %v1354 = vmul.f32 %v906, %v1261
  %v1355 = vmul.f32 %v907, %v1263
  %v1356 = vmul.f32 %v908, %v1265
  %v1357 = vmul.f32 %v909, %v1267
  %v1358 = vmul.f32 %v910, %v1269
  %v1359 = vmul.f32 %v911, %v1271
  %v1360 = vmul.f32 %v912, %v1273
  %v1361 = vmul.f32 %v913, %v1275
  %v1362 = vmul.f32 %v914, %v1277
  %v1363 = vmul.f32 %v915, %v1279
  %v1364 = vmul.f32 %v916, %v1281
  %v1365 = vmul.f32 %v917, %v1283
  %v1366 = vmul.f32 %v918, %v1285
  %v1367 = vmul.f32 %v919, %v1287
  %v1368 = vmul.f32 %v920, %v1289
  %v1369 = vmul.f32 %v921, %v1291
  %v1370 = vmul.f32 %v922, %v1293
  %v1371 = vmul.f32 %v923, %v1295
  %v1372 = vmul.f32 %v924, %v1297
  %v1373 = vmul.f32 %v925, %v1299
  %v1374 = vmul.f32 %v926, %v1301
  %v1375 = vmul.f32 %v927, %v1303
  %v1376 = vmul.f32 %v928, %v1305
  %v1377 = vmul.f32 %v929, %v1307
  %v1378 = vmul.f32 %v930, %v1309
  %v1379 = vmul.f32 %v931, %v1311
  %v1380 = vmul.f32 %v932, %v1313
  %v1381 = vmul.f32 %v933, %v1315
  %v1382 = vmul.f32 %v934, %v1317
  %v1383 = vmul.f32 %v935, %v1319
  %v1384 = vld [vmem:[%s3] sm:$0x1]
  %v1386 = vlaneseq
  %v1387 = vshrl.u32 %v1386, 7
  %v1388 = vsub.s32 0, %v1387
  %v1389 = vrot.slane %v1384, %v1388
  %v1391 = vsub.f32 %v1320, %v1389
  %v1392 = vsub.f32 %v1321, %v1389
  %v1393 = vsub.f32 %v1322, %v1389
  %v1394 = vsub.f32 %v1323, %v1389
  %v1395 = vsub.f32 %v1324, %v1389
  %v1396 = vsub.f32 %v1325, %v1389
  %v1397 = vsub.f32 %v1326, %v1389
  %v1398 = vsub.f32 %v1327, %v1389
  %v1399 = vsub.f32 %v1328, %v1389
  %v1400 = vsub.f32 %v1329, %v1389
  %v1401 = vsub.f32 %v1330, %v1389
  %v1402 = vsub.f32 %v1331, %v1389
  %v1403 = vsub.f32 %v1332, %v1389
  %v1404 = vsub.f32 %v1333, %v1389
  %v1405 = vsub.f32 %v1334, %v1389
  %v1406 = vsub.f32 %v1335, %v1389
  %v1407 = vsub.f32 %v1336, %v1389
  %v1408 = vsub.f32 %v1337, %v1389
  %v1409 = vsub.f32 %v1338, %v1389
  %v1410 = vsub.f32 %v1339, %v1389
  %v1411 = vsub.f32 %v1340, %v1389
  %v1412 = vsub.f32 %v1341, %v1389
  %v1413 = vsub.f32 %v1342, %v1389
  %v1414 = vsub.f32 %v1343, %v1389
  %v1415 = vsub.f32 %v1344, %v1389
  %v1416 = vsub.f32 %v1345, %v1389
  %v1417 = vsub.f32 %v1346, %v1389
  %v1418 = vsub.f32 %v1347, %v1389
  %v1419 = vsub.f32 %v1348, %v1389
  %v1420 = vsub.f32 %v1349, %v1389
  %v1421 = vsub.f32 %v1350, %v1389
  %v1422 = vsub.f32 %v1351, %v1389
  %v1423 = vsub.f32 %v1352, %v1389
  %v1424 = vsub.f32 %v1353, %v1389
  %v1425 = vsub.f32 %v1354, %v1389
  %v1426 = vsub.f32 %v1355, %v1389
  %v1427 = vsub.f32 %v1356, %v1389
  %v1428 = vsub.f32 %v1357, %v1389
  %v1429 = vsub.f32 %v1358, %v1389
  %v1430 = vsub.f32 %v1359, %v1389
  %v1431 = vsub.f32 %v1360, %v1389
  %v1432 = vsub.f32 %v1361, %v1389
  %v1433 = vsub.f32 %v1362, %v1389
  %v1434 = vsub.f32 %v1363, %v1389
  %v1435 = vsub.f32 %v1364, %v1389
  %v1436 = vsub.f32 %v1365, %v1389
  %v1437 = vsub.f32 %v1366, %v1389
  %v1438 = vsub.f32 %v1367, %v1389
  %v1439 = vsub.f32 %v1368, %v1389
  %v1440 = vsub.f32 %v1369, %v1389
  %v1441 = vsub.f32 %v1370, %v1389
  %v1442 = vsub.f32 %v1371, %v1389
  %v1443 = vsub.f32 %v1372, %v1389
  %v1444 = vsub.f32 %v1373, %v1389
  %v1445 = vsub.f32 %v1374, %v1389
  %v1446 = vsub.f32 %v1375, %v1389
  %v1447 = vsub.f32 %v1376, %v1389
  %v1448 = vsub.f32 %v1377, %v1389
  %v1449 = vsub.f32 %v1378, %v1389
  %v1450 = vsub.f32 %v1379, %v1389
  %v1451 = vsub.f32 %v1380, %v1389
  %v1452 = vsub.f32 %v1381, %v1389
  %v1453 = vsub.f32 %v1382, %v1389
  %v1454 = vsub.f32 %v1383, %v1389
  %v1455 = vld [vmem:[%s4] sm:$0x1]
  %v1457 = vlaneseq
  %v1458 = vshrl.u32 %v1457, 7
  %v1459 = vsub.s32 0, %v1458
  %v1460 = vrot.slane %v1455, %v1459
  %v1462 = vmul.f32 %v1391, %v1460
  %v1463 = vmul.f32 %v1392, %v1460
  %v1464 = vmul.f32 %v1393, %v1460
  %v1465 = vmul.f32 %v1394, %v1460
  %v1466 = vmul.f32 %v1395, %v1460
  %v1467 = vmul.f32 %v1396, %v1460
  %v1468 = vmul.f32 %v1397, %v1460
  %v1469 = vmul.f32 %v1398, %v1460
  %v1470 = vmul.f32 %v1399, %v1460
  %v1471 = vmul.f32 %v1400, %v1460
  %v1472 = vmul.f32 %v1401, %v1460
  %v1473 = vmul.f32 %v1402, %v1460
  %v1474 = vmul.f32 %v1403, %v1460
  %v1475 = vmul.f32 %v1404, %v1460
  %v1476 = vmul.f32 %v1405, %v1460
  %v1477 = vmul.f32 %v1406, %v1460
  %v1478 = vmul.f32 %v1407, %v1460
  %v1479 = vmul.f32 %v1408, %v1460
  %v1480 = vmul.f32 %v1409, %v1460
  %v1481 = vmul.f32 %v1410, %v1460
  %v1482 = vmul.f32 %v1411, %v1460
  %v1483 = vmul.f32 %v1412, %v1460
  %v1484 = vmul.f32 %v1413, %v1460
  %v1485 = vmul.f32 %v1414, %v1460
  %v1486 = vmul.f32 %v1415, %v1460
  %v1487 = vmul.f32 %v1416, %v1460
  %v1488 = vmul.f32 %v1417, %v1460
  %v1489 = vmul.f32 %v1418, %v1460
  %v1490 = vmul.f32 %v1419, %v1460
  %v1491 = vmul.f32 %v1420, %v1460
  %v1492 = vmul.f32 %v1421, %v1460
  %v1493 = vmul.f32 %v1422, %v1460
  %v1494 = vmul.f32 %v1423, %v1460
  %v1495 = vmul.f32 %v1424, %v1460
  %v1496 = vmul.f32 %v1425, %v1460
  %v1497 = vmul.f32 %v1426, %v1460
  %v1498 = vmul.f32 %v1427, %v1460
  %v1499 = vmul.f32 %v1428, %v1460
  %v1500 = vmul.f32 %v1429, %v1460
  %v1501 = vmul.f32 %v1430, %v1460
  %v1502 = vmul.f32 %v1431, %v1460
  %v1503 = vmul.f32 %v1432, %v1460
  %v1504 = vmul.f32 %v1433, %v1460
  %v1505 = vmul.f32 %v1434, %v1460
  %v1506 = vmul.f32 %v1435, %v1460
  %v1507 = vmul.f32 %v1436, %v1460
  %v1508 = vmul.f32 %v1437, %v1460
  %v1509 = vmul.f32 %v1438, %v1460
  %v1510 = vmul.f32 %v1439, %v1460
  %v1511 = vmul.f32 %v1440, %v1460
  %v1512 = vmul.f32 %v1441, %v1460
  %v1513 = vmul.f32 %v1442, %v1460
  %v1514 = vmul.f32 %v1443, %v1460
  %v1515 = vmul.f32 %v1444, %v1460
  %v1516 = vmul.f32 %v1445, %v1460
  %v1517 = vmul.f32 %v1446, %v1460
  %v1518 = vmul.f32 %v1447, %v1460
  %v1519 = vmul.f32 %v1448, %v1460
  %v1520 = vmul.f32 %v1449, %v1460
  %v1521 = vmul.f32 %v1450, %v1460
  %v1522 = vmul.f32 %v1451, %v1460
  %v1523 = vmul.f32 %v1452, %v1460
  %v1524 = vmul.f32 %v1453, %v1460
  %v1525 = vmul.f32 %v1454, %v1460
  %1526 = vst [vmem:[%s5] sm:$0xff] %v1462
  %1527 = vst [vmem:[%s5 + $0x8] sm:$0xff] %v1463
  %1528 = vst [vmem:[%s5 + $0x10] sm:$0xff] %v1464
  %1529 = vst [vmem:[%s5 + $0x18] sm:$0xff] %v1465
  %1530 = vst [vmem:[%s5 + $0x20] sm:$0xff] %v1466
  %1531 = vst [vmem:[%s5 + $0x28] sm:$0xff] %v1467
  %1532 = vst [vmem:[%s5 + $0x30] sm:$0xff] %v1468
  %1533 = vst [vmem:[%s5 + $0x38] sm:$0xff] %v1469
  %1534 = vst [vmem:[%s5 + $0x40] sm:$0xff] %v1470
  %1535 = vst [vmem:[%s5 + $0x48] sm:$0xff] %v1471
  %1536 = vst [vmem:[%s5 + $0x50] sm:$0xff] %v1472
  %1537 = vst [vmem:[%s5 + $0x58] sm:$0xff] %v1473
  %1538 = vst [vmem:[%s5 + $0x60] sm:$0xff] %v1474
  %1539 = vst [vmem:[%s5 + $0x68] sm:$0xff] %v1475
  %1540 = vst [vmem:[%s5 + $0x70] sm:$0xff] %v1476
  %1541 = vst [vmem:[%s5 + $0x78] sm:$0xff] %v1477
  %1542 = vst [vmem:[%s5 + $0x80] sm:$0xff] %v1478
  %1543 = vst [vmem:[%s5 + $0x88] sm:$0xff] %v1479
  %1544 = vst [vmem:[%s5 + $0x90] sm:$0xff] %v1480
  %1545 = vst [vmem:[%s5 + $0x98] sm:$0xff] %v1481
  %1546 = vst [vmem:[%s5 + $0xa0] sm:$0xff] %v1482
  %1547 = vst [vmem:[%s5 + $0xa8] sm:$0xff] %v1483
  %1548 = vst [vmem:[%s5 + $0xb0] sm:$0xff] %v1484
  %1549 = vst [vmem:[%s5 + $0xb8] sm:$0xff] %v1485
  %1550 = vst [vmem:[%s5 + $0xc0] sm:$0xff] %v1486
  %1551 = vst [vmem:[%s5 + $0xc8] sm:$0xff] %v1487
  %1552 = vst [vmem:[%s5 + $0xd0] sm:$0xff] %v1488
  %1553 = vst [vmem:[%s5 + $0xd8] sm:$0xff] %v1489
  %1554 = vst [vmem:[%s5 + $0xe0] sm:$0xff] %v1490
  %1555 = vst [vmem:[%s5 + $0xe8] sm:$0xff] %v1491
  %1556 = vst [vmem:[%s5 + $0xf0] sm:$0xff] %v1492
  %1557 = vst [vmem:[%s5 + $0xf8] sm:$0xff] %v1493
  %1558 = vst [vmem:[%s5 + $0x100] sm:$0xff] %v1494
  %1559 = vst [vmem:[%s5 + $0x108] sm:$0xff] %v1495
  %1560 = vst [vmem:[%s5 + $0x110] sm:$0xff] %v1496
  %1561 = vst [vmem:[%s5 + $0x118] sm:$0xff] %v1497
  %1562 = vst [vmem:[%s5 + $0x120] sm:$0xff] %v1498
  %1563 = vst [vmem:[%s5 + $0x128] sm:$0xff] %v1499
  %1564 = vst [vmem:[%s5 + $0x130] sm:$0xff] %v1500
  %1565 = vst [vmem:[%s5 + $0x138] sm:$0xff] %v1501
  %1566 = vst [vmem:[%s5 + $0x140] sm:$0xff] %v1502
  %1567 = vst [vmem:[%s5 + $0x148] sm:$0xff] %v1503
  %1568 = vst [vmem:[%s5 + $0x150] sm:$0xff] %v1504
  %1569 = vst [vmem:[%s5 + $0x158] sm:$0xff] %v1505
  %1570 = vst [vmem:[%s5 + $0x160] sm:$0xff] %v1506
  %1571 = vst [vmem:[%s5 + $0x168] sm:$0xff] %v1507
  %1572 = vst [vmem:[%s5 + $0x170] sm:$0xff] %v1508
  %1573 = vst [vmem:[%s5 + $0x178] sm:$0xff] %v1509
  %1574 = vst [vmem:[%s5 + $0x180] sm:$0xff] %v1510
  %1575 = vst [vmem:[%s5 + $0x188] sm:$0xff] %v1511
  %1576 = vst [vmem:[%s5 + $0x190] sm:$0xff] %v1512
  %1577 = vst [vmem:[%s5 + $0x198] sm:$0xff] %v1513
  %1578 = vst [vmem:[%s5 + $0x1a0] sm:$0xff] %v1514
  %1579 = vst [vmem:[%s5 + $0x1a8] sm:$0xff] %v1515
  %1580 = vst [vmem:[%s5 + $0x1b0] sm:$0xff] %v1516
  %1581 = vst [vmem:[%s5 + $0x1b8] sm:$0xff] %v1517
  %1582 = vst [vmem:[%s5 + $0x1c0] sm:$0xff] %v1518
  %1583 = vst [vmem:[%s5 + $0x1c8] sm:$0xff] %v1519
  %1584 = vst [vmem:[%s5 + $0x1d0] sm:$0xff] %v1520
  %1585 = vst [vmem:[%s5 + $0x1d8] sm:$0xff] %v1521
  %1586 = vst [vmem:[%s5 + $0x1e0] sm:$0xff] %v1522
  %1587 = vst [vmem:[%s5 + $0x1e8] sm:$0xff] %v1523
  %1588 = vst [vmem:[%s5 + $0x1f0] sm:$0xff] %v1524
  %1589 = vst [vmem:[%s5 + $0x1f8] sm:$0xff] %v1525
  // Predicated region
  $region22: #{sn_gated_conv2d_v0.3} parent=0 // pred_check
    _
  $region23: #{sn_gated_conv2d_v0.3} parent=0 // pred_check_branch
    %1591 = sbr.rel (0) target = $region25
  $region24: #{sn_gated_conv2d_v0.3} parent=0 // pred_region
    _
  $region25: #{sn_gated_conv2d_v0.3} parent=0 // pred_fallthru
    _
  // Predicated region
  $region26: #{sn_gated_conv2d_v0.3} parent=0 // pred_check
    _
  $region27: #{sn_gated_conv2d_v0.3} parent=0 // pred_check_branch
    %1593 = sbr.rel (0) target = $region29
  $region28: #{sn_gated_conv2d_v0.3} parent=0 // pred_region
    _
  $region29: #{sn_gated_conv2d_v0.3} parent=0 // pred_fallthru
    _

</llo_original>
